<compile_context>
chip_gen: v6e
topology: v6e:2x2x1
jax: 0.10.0
libtpu: 0.0.40
codegen_flags: <defaults>
</compile_context>

<pallas_src>
import functools
import math

import jax
import jax.numpy as jnp
from jax.experimental import pallas as pl
from jax.experimental.pallas import tpu as pltpu


# --------------------------------------------------------------------------
# Kernel
# --------------------------------------------------------------------------
def _make_decomposition_kernel(n_det: int, n_mean: int, n_lv: int, mxu_dtype):
    """Fused kernel.

    Ref order:
      x,
      (w, b) * n_det      deterministic Filter
      (w, b) * n_mean     noise-mean Filter
      (w, b) * n_lv       noise-logvar Filter (extra ReLU after final Linear)
      out_mean, log_var, mean, det          (all padded to lane-dense width)
    Weights are (in, out); biases are (1, out).
    """

    def run_mlp(h, refs, start, n_layers, final_relu):
        for layer in range(n_layers):
            w = refs[start + 2 * layer][...]
            b = refs[start + 2 * layer + 1][...]
            h = jnp.dot(
                h.astype(mxu_dtype),
                w.astype(mxu_dtype),
                preferred_element_type=jnp.float32,
            )
            h = h + b.astype(jnp.float32)            # bias add / ReLU in f32
            if layer < n_layers - 1 or final_relu:
                h = jnp.maximum(h, 0.0)
        return h

    def kernel(*refs):
        x = refs[0][...]                              # (tm, d_in), f32
        out_mean_ref, log_var_ref, mean_ref, det_ref = refs[-4:]

        i = 1
        det = run_mlp(x, refs, i, n_det, final_relu=False)
        i += 2 * n_det
        mean = run_mlp(x, refs, i, n_mean, final_relu=False)
        i += 2 * n_mean
        log_var = run_mlp(x, refs, i, n_lv, final_relu=True)

        out_mean_ref[...] = (det + mean).astype(out_mean_ref.dtype)
        log_var_ref[...] = log_var.astype(log_var_ref.dtype)
        mean_ref[...] = mean.astype(mean_ref.dtype)
        det_ref[...] = det.astype(det_ref.dtype)

    return kernel


# --------------------------------------------------------------------------
# Wrapper helpers
# --------------------------------------------------------------------------
def _pick_tm(B: int, max_tm: int = 512) -> int:
    """Largest batch tile (multiple of 8, <= max_tm) that still leaves the
    grid with >= 2 steps so both v7x TensorCores get work.  Prefer multiples
    of 128 (full MXU M passes on v5e) once large enough."""
    if B <= 8:
        return 8
    tm = max(8, min(max_tm, (B // 2) // 8 * 8))
    if tm >= 128:
        tm = (tm // 128) * 128
    return tm


def _pad_last_layer(w, b, d_pad: int):
    """Zero-pad the final Linear to `d_pad` output lanes (lane-dense stores)."""
    d_out = w.shape[1]
    if d_out == d_pad:
        return w, b
    pad = d_pad - d_out
    return jnp.pad(w, ((0, 0), (0, pad))), jnp.pad(b, ((0, 0), (0, pad)))


@functools.partial(jax.jit, static_argnames=("tm", "mxu_dtype"))
def decomposition_forward(x, det_params, mean_params, lv_params, *,
                          tm=None, mxu_dtype=jnp.float32):
    """Runs the fused Decomposition Pallas kernel.

    x          : (B, d_in) float32
    *_params   : lists of (W:(d_in_l, d_out_l), b:(1, d_out_l))
    Returns (out_mean, out_var, mean_of_noise, log_var_of_noise, x_det),
    matching the PyTorch module (out_var is log_var_of_noise).
    """
    B, d_in = x.shape
    d_out = det_params[-1][0].shape[1]
    assert mean_params[-1][0].shape[1] == d_out
    assert lv_params[-1][0].shape[1] == d_out
    assert mean_params[0][0].shape[0] == d_in and lv_params[0][0].shape[0] == d_in

    if tm is None:
        tm = _pick_tm(B)

    # Lane-dense output width (multiple of 128) -> unmasked vector stores.
    d_pad = pl.cdiv(d_out, 128) * 128

    det_p = list(det_params)
    mean_p = list(mean_params)
    lv_p = list(lv_params)
    det_p[-1] = _pad_last_layer(*det_p[-1], d_pad)
    mean_p[-1] = _pad_last_layer(*mean_p[-1], d_pad)
    lv_p[-1] = _pad_last_layer(*lv_p[-1], d_pad)
    all_params = (*det_p, *mean_p, *lv_p)

    grid = (pl.cdiv(B, tm),)

    # Grid-invariant params: single VMEM buffer (no double buffering needed).
    const_mode = pl.Buffered(1)

    in_specs = [pl.BlockSpec((tm, d_in), lambda i: (i, 0))]
    flat_args = [x]
    for w, b in all_params:
        in_specs.append(
            pl.BlockSpec(w.shape, lambda i: (0, 0), pipeline_mode=const_mode))
        in_specs.append(
            pl.BlockSpec(b.shape, lambda i: (0, 0), pipeline_mode=const_mode))
        flat_args += [w, b]

    out_spec = pl.BlockSpec((tm, d_pad), lambda i: (i, 0))
    out_sds = jax.ShapeDtypeStruct((B, d_pad), x.dtype)

    # Explicit VMEM budget with headroom (>= 32 MiB default, <= v7x physical).
    itemsize = jnp.dtype(x.dtype).itemsize
    weight_bytes = sum(w.size * w.dtype.itemsize + b.size * b.dtype.itemsize
                       for w, b in all_params)
    est = 2 * tm * d_in * itemsize            # activation tile, double-buffered
    est += 4 * 2 * tm * d_pad * itemsize      # four output tiles, double-buffered
    est += weight_bytes                       # single-buffered params
    vmem_limit = int(min(64 << 20, max(32 << 20, 2 * est)))

    kernel = _make_decomposition_kernel(len(det_p), len(mean_p), len(lv_p),
                                        mxu_dtype)

    out_mean_p, log_var_pd, mean_pd, det_pd = pl.pallas_call(
        kernel,
        out_shape=(out_sds, out_sds, out_sds, out_sds),
        grid_spec=pltpu.PrefetchScalarGridSpec(
            num_scalar_prefetch=0,
            grid=grid,
            in_specs=in_specs,
            out_specs=(out_spec, out_spec, out_spec, out_spec),
        ),
        compiler_params=pltpu.CompilerParams(
            dimension_semantics=("parallel",),
            vmem_limit_bytes=vmem_limit,
        ),
    )(*flat_args)

    out_mean = out_mean_p[:, :d_out]
    log_var = log_var_pd[:, :d_out]
    mean = mean_pd[:, :d_out]
    x_det = det_pd[:, :d_out]
    # (out_mean, out_var, mean_of_noise, log_var_of_noise, x)
    return out_mean, log_var, mean, log_var, x_det


# --------------------------------------------------------------------------
# Parameter init (mirrors nn.Linear's U(-1/sqrt(fan_in), 1/sqrt(fan_in)))
# --------------------------------------------------------------------------
def init_filter_params(key, network_shape):
    params = []
    for d_i, d_o in zip(network_shape[:-1], network_shape[1:]):
        key, kw, kb = jax.random.split(key, 3)
        bound = 1.0 / math.sqrt(d_i)
        w = jax.random.uniform(kw, (d_i, d_o), jnp.float32, -bound, bound)
        b = jax.random.uniform(kb, (1, d_o), jnp.float32, -bound, bound)
        params.append((w, b))
    return params


# --------------------------------------------------------------------------
# Pure-JAX reference
# --------------------------------------------------------------------------
def _mlp_ref(x, params, final_relu=False):
    h = x
    n = len(params)
    for i, (w, b) in enumerate(params):
        h = h @ w + b
        if i < n - 1 or final_relu:
            h = jnp.maximum(h, 0.0)
    return h


def decomposition_forward_ref(x, det_params, mean_params, lv_params):
    det = _mlp_ref(x, det_params)
    mean = _mlp_ref(x, mean_params)
    log_var = _mlp_ref(x, lv_params, final_relu=True)
    return det + mean, log_var, mean, log_var, det


# --------------------------------------------------------------------------
# Demo / self-check
# --------------------------------------------------------------------------
if __name__ == "__main__":
    # Small shapes consistent with Decomposition(filter_shape, noise_shape):
    # both MLPs share input width 32 and output width 16 (required by x+mean).
    filter_shape = (32, 64, 48, 16)
    noise_shape = (32, 64, 16)
    batch = 16   # -> tm=8, grid=(2,): exercises the multi-step / megacore path

    key = jax.random.PRNGKey(0)
    key, kx, kd, km, kl = jax.random.split(key, 5)
    x = jax.random.normal(kx, (batch, filter_shape[0]), dtype=jnp.float32)
    det_params = init_filter_params(kd, filter_shape)
    mean_params = init_filter_params(km, noise_shape)
    lv_params = init_filter_params(kl, noise_shape)

    # mxu_dtype=jnp.bfloat16 is recommended on v6e/v7x; f32 default keeps v5e
    # VPU-native elementwise and strict numerics.
    outs = decomposition_forward(x, det_params, mean_params, lv_params)
    outs = [jax.block_until_ready(o) for o in outs]

    refs = decomposition_forward_ref(x, det_params, mean_params, lv_params)
    names = ("out_mean", "out_var", "mean_of_noise", "log_var_of_noise", "x")
    for name, o, r in zip(names, outs, refs):
        assert o.shape == r.shape, f"{name} shape {o.shape} != {r.shape}"
        assert jnp.allclose(o, r, atol=1e-4, rtol=1e-4), f"mismatch in {name}"

    print("KERNEL_OK")
</pallas_src>

<mosaic_0001>
module attributes {stable_mosaic.version = 11 : i64} {
  func.func @kernel(%arg0: i32, %arg1: memref<8x32xf32, #tpu.memory_space<vmem>>, %arg2: memref<32x64xf32, #tpu.memory_space<vmem>>, %arg3: memref<1x64xf32, #tpu.memory_space<vmem>>, %arg4: memref<64x48xf32, #tpu.memory_space<vmem>>, %arg5: memref<1x48xf32, #tpu.memory_space<vmem>>, %arg6: memref<48x128xf32, #tpu.memory_space<vmem>>, %arg7: memref<1x128xf32, #tpu.memory_space<vmem>>, %arg8: memref<32x64xf32, #tpu.memory_space<vmem>>, %arg9: memref<1x64xf32, #tpu.memory_space<vmem>>, %arg10: memref<64x128xf32, #tpu.memory_space<vmem>>, %arg11: memref<1x128xf32, #tpu.memory_space<vmem>>, %arg12: memref<32x64xf32, #tpu.memory_space<vmem>>, %arg13: memref<1x64xf32, #tpu.memory_space<vmem>>, %arg14: memref<64x128xf32, #tpu.memory_space<vmem>>, %arg15: memref<1x128xf32, #tpu.memory_space<vmem>>, %arg16: memref<8x128xf32, #tpu.memory_space<vmem>>, %arg17: memref<8x128xf32, #tpu.memory_space<vmem>>, %arg18: memref<8x128xf32, #tpu.memory_space<vmem>>, %arg19: memref<8x128xf32, #tpu.memory_space<vmem>>) attributes {dimension_semantics = [#tpu.dimension_semantics<parallel>], iteration_bounds = array<i64: 2>, scalar_prefetch = 0 : i64, scratch_operands = 0 : i64, tpu.core_type = #tpu.core_type<tc>, window_params = [{transform_indices = @transform_0, window_bounds = array<i64: 8, 32>}, {pipeline_mode = #tpu.pipeline_mode<synchronous>, transform_indices = @transform_1, window_bounds = array<i64: 32, 64>}, {pipeline_mode = #tpu.pipeline_mode<synchronous>, transform_indices = @transform_2, window_bounds = array<i64: 1, 64>}, {pipeline_mode = #tpu.pipeline_mode<synchronous>, transform_indices = @transform_3, window_bounds = array<i64: 64, 48>}, {pipeline_mode = #tpu.pipeline_mode<synchronous>, transform_indices = @transform_4, window_bounds = array<i64: 1, 48>}, {pipeline_mode = #tpu.pipeline_mode<synchronous>, transform_indices = @transform_5, window_bounds = array<i64: 48, 128>}, {pipeline_mode = #tpu.pipeline_mode<synchronous>, transform_indices = @transform_6, window_bounds = array<i64: 1, 128>}, {pipeline_mode = #tpu.pipeline_mode<synchronous>, transform_indices = @transform_7, window_bounds = array<i64: 32, 64>}, {pipeline_mode = #tpu.pipeline_mode<synchronous>, transform_indices = @transform_8, window_bounds = array<i64: 1, 64>}, {pipeline_mode = #tpu.pipeline_mode<synchronous>, transform_indices = @transform_9, window_bounds = array<i64: 64, 128>}, {pipeline_mode = #tpu.pipeline_mode<synchronous>, transform_indices = @transform_10, window_bounds = array<i64: 1, 128>}, {pipeline_mode = #tpu.pipeline_mode<synchronous>, transform_indices = @transform_11, window_bounds = array<i64: 32, 64>}, {pipeline_mode = #tpu.pipeline_mode<synchronous>, transform_indices = @transform_12, window_bounds = array<i64: 1, 64>}, {pipeline_mode = #tpu.pipeline_mode<synchronous>, transform_indices = @transform_13, window_bounds = array<i64: 64, 128>}, {pipeline_mode = #tpu.pipeline_mode<synchronous>, transform_indices = @transform_14, window_bounds = array<i64: 1, 128>}, {transform_indices = @transform_15, window_bounds = array<i64: 8, 128>}, {transform_indices = @transform_16, window_bounds = array<i64: 8, 128>}, {transform_indices = @transform_17, window_bounds = array<i64: 8, 128>}, {transform_indices = @transform_18, window_bounds = array<i64: 8, 128>}]} {
    %c0 = arith.constant 0 : index
    %c0_0 = arith.constant 0 : index
    %0 = vector.load %arg1[%c0, %c0_0] : memref<8x32xf32, #tpu.memory_space<vmem>>, vector<8x32xf32>
    %c0_1 = arith.constant 0 : index
    %c0_2 = arith.constant 0 : index
    %1 = vector.load %arg2[%c0_1, %c0_2] : memref<32x64xf32, #tpu.memory_space<vmem>>, vector<32x64xf32>
    %c0_3 = arith.constant 0 : index
    %c0_4 = arith.constant 0 : index
    %2 = vector.load %arg3[%c0_3, %c0_4] : memref<1x64xf32, #tpu.memory_space<vmem>>, vector<1x64xf32>
    %cst = arith.constant dense<0.000000e+00> : vector<8x64xf32>
    %3 = tpu.matmul %0, %1, %cst {dimension_numbers = #tpu.dot_dimension_numbers<[1], [0], [0], [1], [0, 0, 1, 1], [], []>} : vector<8x32xf32>, vector<32x64xf32>, vector<8x64xf32> -> vector<8x64xf32>
    %4 = vector.broadcast %2 : vector<1x64xf32> to vector<8x64xf32>
    %5 = arith.addf %3, %4 : vector<8x64xf32>
    %cst_5 = arith.constant 0.000000e+00 : f32
    %6 = vector.broadcast %cst_5 : f32 to vector<8x64xf32>
    %7 = arith.maximumf %5, %6 : vector<8x64xf32>
    %c0_6 = arith.constant 0 : index
    %c0_7 = arith.constant 0 : index
    %8 = vector.load %arg4[%c0_6, %c0_7] : memref<64x48xf32, #tpu.memory_space<vmem>>, vector<64x48xf32>
    %c0_8 = arith.constant 0 : index
    %c0_9 = arith.constant 0 : index
    %9 = vector.load %arg5[%c0_8, %c0_9] : memref<1x48xf32, #tpu.memory_space<vmem>>, vector<1x48xf32>
    %cst_10 = arith.constant dense<0.000000e+00> : vector<8x48xf32>
    %10 = tpu.matmul %7, %8, %cst_10 {dimension_numbers = #tpu.dot_dimension_numbers<[1], [0], [0], [1], [0, 0, 1, 1], [], []>} : vector<8x64xf32>, vector<64x48xf32>, vector<8x48xf32> -> vector<8x48xf32>
    %11 = vector.broadcast %9 : vector<1x48xf32> to vector<8x48xf32>
    %12 = arith.addf %10, %11 : vector<8x48xf32>
    %cst_11 = arith.constant 0.000000e+00 : f32
    %13 = vector.broadcast %cst_11 : f32 to vector<8x48xf32>
    %14 = arith.maximumf %12, %13 : vector<8x48xf32>
    %c0_12 = arith.constant 0 : index
    %c0_13 = arith.constant 0 : index
    %15 = vector.load %arg6[%c0_12, %c0_13] : memref<48x128xf32, #tpu.memory_space<vmem>>, vector<48x128xf32>
    %c0_14 = arith.constant 0 : index
    %c0_15 = arith.constant 0 : index
    %16 = vector.load %arg7[%c0_14, %c0_15] : memref<1x128xf32, #tpu.memory_space<vmem>>, vector<1x128xf32>
    %cst_16 = arith.constant dense<0.000000e+00> : vector<8x128xf32>
    %17 = tpu.matmul %14, %15, %cst_16 {dimension_numbers = #tpu.dot_dimension_numbers<[1], [0], [0], [1], [0, 0, 1, 1], [], []>} : vector<8x48xf32>, vector<48x128xf32>, vector<8x128xf32> -> vector<8x128xf32>
    %18 = vector.broadcast %16 : vector<1x128xf32> to vector<8x128xf32>
    %19 = arith.addf %17, %18 : vector<8x128xf32>
    %c0_17 = arith.constant 0 : index
    %c0_18 = arith.constant 0 : index
    %20 = vector.load %arg8[%c0_17, %c0_18] : memref<32x64xf32, #tpu.memory_space<vmem>>, vector<32x64xf32>
    %c0_19 = arith.constant 0 : index
    %c0_20 = arith.constant 0 : index
    %21 = vector.load %arg9[%c0_19, %c0_20] : memref<1x64xf32, #tpu.memory_space<vmem>>, vector<1x64xf32>
    %cst_21 = arith.constant dense<0.000000e+00> : vector<8x64xf32>
    %22 = tpu.matmul %0, %20, %cst_21 {dimension_numbers = #tpu.dot_dimension_numbers<[1], [0], [0], [1], [0, 0, 1, 1], [], []>} : vector<8x32xf32>, vector<32x64xf32>, vector<8x64xf32> -> vector<8x64xf32>
    %23 = vector.broadcast %21 : vector<1x64xf32> to vector<8x64xf32>
    %24 = arith.addf %22, %23 : vector<8x64xf32>
    %cst_22 = arith.constant 0.000000e+00 : f32
    %25 = vector.broadcast %cst_22 : f32 to vector<8x64xf32>
    %26 = arith.maximumf %24, %25 : vector<8x64xf32>
    %c0_23 = arith.constant 0 : index
    %c0_24 = arith.constant 0 : index
    %27 = vector.load %arg10[%c0_23, %c0_24] : memref<64x128xf32, #tpu.memory_space<vmem>>, vector<64x128xf32>
    %c0_25 = arith.constant 0 : index
    %c0_26 = arith.constant 0 : index
    %28 = vector.load %arg11[%c0_25, %c0_26] : memref<1x128xf32, #tpu.memory_space<vmem>>, vector<1x128xf32>
    %cst_27 = arith.constant dense<0.000000e+00> : vector<8x128xf32>
    %29 = tpu.matmul %26, %27, %cst_27 {dimension_numbers = #tpu.dot_dimension_numbers<[1], [0], [0], [1], [0, 0, 1, 1], [], []>} : vector<8x64xf32>, vector<64x128xf32>, vector<8x128xf32> -> vector<8x128xf32>
    %30 = vector.broadcast %28 : vector<1x128xf32> to vector<8x128xf32>
    %31 = arith.addf %29, %30 : vector<8x128xf32>
    %c0_28 = arith.constant 0 : index
    %c0_29 = arith.constant 0 : index
    %32 = vector.load %arg12[%c0_28, %c0_29] : memref<32x64xf32, #tpu.memory_space<vmem>>, vector<32x64xf32>
    %c0_30 = arith.constant 0 : index
    %c0_31 = arith.constant 0 : index
    %33 = vector.load %arg13[%c0_30, %c0_31] : memref<1x64xf32, #tpu.memory_space<vmem>>, vector<1x64xf32>
    %cst_32 = arith.constant dense<0.000000e+00> : vector<8x64xf32>
    %34 = tpu.matmul %0, %32, %cst_32 {dimension_numbers = #tpu.dot_dimension_numbers<[1], [0], [0], [1], [0, 0, 1, 1], [], []>} : vector<8x32xf32>, vector<32x64xf32>, vector<8x64xf32> -> vector<8x64xf32>
    %35 = vector.broadcast %33 : vector<1x64xf32> to vector<8x64xf32>
    %36 = arith.addf %34, %35 : vector<8x64xf32>
    %cst_33 = arith.constant 0.000000e+00 : f32
    %37 = vector.broadcast %cst_33 : f32 to vector<8x64xf32>
    %38 = arith.maximumf %36, %37 : vector<8x64xf32>
    %c0_34 = arith.constant 0 : index
    %c0_35 = arith.constant 0 : index
    %39 = vector.load %arg14[%c0_34, %c0_35] : memref<64x128xf32, #tpu.memory_space<vmem>>, vector<64x128xf32>
    %c0_36 = arith.constant 0 : index
    %c0_37 = arith.constant 0 : index
    %40 = vector.load %arg15[%c0_36, %c0_37] : memref<1x128xf32, #tpu.memory_space<vmem>>, vector<1x128xf32>
    %cst_38 = arith.constant dense<0.000000e+00> : vector<8x128xf32>
    %41 = tpu.matmul %38, %39, %cst_38 {dimension_numbers = #tpu.dot_dimension_numbers<[1], [0], [0], [1], [0, 0, 1, 1], [], []>} : vector<8x64xf32>, vector<64x128xf32>, vector<8x128xf32> -> vector<8x128xf32>
    %42 = vector.broadcast %40 : vector<1x128xf32> to vector<8x128xf32>
    %43 = arith.addf %41, %42 : vector<8x128xf32>
    %cst_39 = arith.constant 0.000000e+00 : f32
    %44 = vector.broadcast %cst_39 : f32 to vector<8x128xf32>
    %45 = arith.maximumf %43, %44 : vector<8x128xf32>
    %46 = arith.addf %19, %31 : vector<8x128xf32>
    %c0_40 = arith.constant 0 : index
    %c0_41 = arith.constant 0 : index
    %47 = vector.load %arg16[%c0_40, %c0_41] : memref<8x128xf32, #tpu.memory_space<vmem>>, vector<8x128xf32>
    tpu.vector_store %arg16[%c0_40, %c0_41], %46 {strides = array<i32>} : memref<8x128xf32, #tpu.memory_space<vmem>>, vector<8x128xf32>,
    %c0_42 = arith.constant 0 : index
    %c0_43 = arith.constant 0 : index
    %48 = vector.load %arg17[%c0_42, %c0_43] : memref<8x128xf32, #tpu.memory_space<vmem>>, vector<8x128xf32>
    tpu.vector_store %arg17[%c0_42, %c0_43], %45 {strides = array<i32>} : memref<8x128xf32, #tpu.memory_space<vmem>>, vector<8x128xf32>,
    %c0_44 = arith.constant 0 : index
    %c0_45 = arith.constant 0 : index
    %49 = vector.load %arg18[%c0_44, %c0_45] : memref<8x128xf32, #tpu.memory_space<vmem>>, vector<8x128xf32>
    tpu.vector_store %arg18[%c0_44, %c0_45], %31 {strides = array<i32>} : memref<8x128xf32, #tpu.memory_space<vmem>>, vector<8x128xf32>,
    %c0_46 = arith.constant 0 : index
    %c0_47 = arith.constant 0 : index
    %50 = vector.load %arg19[%c0_46, %c0_47] : memref<8x128xf32, #tpu.memory_space<vmem>>, vector<8x128xf32>
    tpu.vector_store %arg19[%c0_46, %c0_47], %19 {strides = array<i32>} : memref<8x128xf32, #tpu.memory_space<vmem>>, vector<8x128xf32>,
    return
  }
  func.func @transform_0(%arg0: i32) -> (i32, i32) {
    %c0_i32 = arith.constant 0 : i32
    %c0_i32_0 = arith.constant 0 : i32
    return %arg0, %c0_i32 : i32, i32
  }
  func.func @transform_1(%arg0: i32) -> (i32, i32) {
    %c0_i32 = arith.constant 0 : i32
    %c0_i32_0 = arith.constant 0 : i32
    %c0_i32_1 = arith.constant 0 : i32
    return %c0_i32, %c0_i32_0 : i32, i32
  }
  func.func @transform_2(%arg0: i32) -> (i32, i32) {
    %c0_i32 = arith.constant 0 : i32
    %c0_i32_0 = arith.constant 0 : i32
    %c0_i32_1 = arith.constant 0 : i32
    return %c0_i32, %c0_i32_0 : i32, i32
  }
  func.func @transform_3(%arg0: i32) -> (i32, i32) {
    %c0_i32 = arith.constant 0 : i32
    %c0_i32_0 = arith.constant 0 : i32
    %c0_i32_1 = arith.constant 0 : i32
    return %c0_i32, %c0_i32_0 : i32, i32
  }
  func.func @transform_4(%arg0: i32) -> (i32, i32) {
    %c0_i32 = arith.constant 0 : i32
    %c0_i32_0 = arith.constant 0 : i32
    %c0_i32_1 = arith.constant 0 : i32
    return %c0_i32, %c0_i32_0 : i32, i32
  }
  func.func @transform_5(%arg0: i32) -> (i32, i32) {
    %c0_i32 = arith.constant 0 : i32
    %c0_i32_0 = arith.constant 0 : i32
    %c0_i32_1 = arith.constant 0 : i32
    return %c0_i32, %c0_i32_0 : i32, i32
  }
  func.func @transform_6(%arg0: i32) -> (i32, i32) {
    %c0_i32 = arith.constant 0 : i32
    %c0_i32_0 = arith.constant 0 : i32
    %c0_i32_1 = arith.constant 0 : i32
    return %c0_i32, %c0_i32_0 : i32, i32
  }
  func.func @transform_7(%arg0: i32) -> (i32, i32) {
    %c0_i32 = arith.constant 0 : i32
    %c0_i32_0 = arith.constant 0 : i32
    %c0_i32_1 = arith.constant 0 : i32
    return %c0_i32, %c0_i32_0 : i32, i32
  }
  func.func @transform_8(%arg0: i32) -> (i32, i32) {
    %c0_i32 = arith.constant 0 : i32
    %c0_i32_0 = arith.constant 0 : i32
    %c0_i32_1 = arith.constant 0 : i32
    return %c0_i32, %c0_i32_0 : i32, i32
  }
  func.func @transform_9(%arg0: i32) -> (i32, i32) {
    %c0_i32 = arith.constant 0 : i32
    %c0_i32_0 = arith.constant 0 : i32
    %c0_i32_1 = arith.constant 0 : i32
    return %c0_i32, %c0_i32_0 : i32, i32
  }
  func.func @transform_10(%arg0: i32) -> (i32, i32) {
    %c0_i32 = arith.constant 0 : i32
    %c0_i32_0 = arith.constant 0 : i32
    %c0_i32_1 = arith.constant 0 : i32
    return %c0_i32, %c0_i32_0 : i32, i32
  }
  func.func @transform_11(%arg0: i32) -> (i32, i32) {
    %c0_i32 = arith.constant 0 : i32
    %c0_i32_0 = arith.constant 0 : i32
    %c0_i32_1 = arith.constant 0 : i32
    return %c0_i32, %c0_i32_0 : i32, i32
  }
  func.func @transform_12(%arg0: i32) -> (i32, i32) {
    %c0_i32 = arith.constant 0 : i32
    %c0_i32_0 = arith.constant 0 : i32
    %c0_i32_1 = arith.constant 0 : i32
    return %c0_i32, %c0_i32_0 : i32, i32
  }
  func.func @transform_13(%arg0: i32) -> (i32, i32) {
    %c0_i32 = arith.constant 0 : i32
    %c0_i32_0 = arith.constant 0 : i32
    %c0_i32_1 = arith.constant 0 : i32
    return %c0_i32, %c0_i32_0 : i32, i32
  }
  func.func @transform_14(%arg0: i32) -> (i32, i32) {
    %c0_i32 = arith.constant 0 : i32
    %c0_i32_0 = arith.constant 0 : i32
    %c0_i32_1 = arith.constant 0 : i32
    return %c0_i32, %c0_i32_0 : i32, i32
  }
  func.func @transform_15(%arg0: i32) -> (i32, i32) {
    %c0_i32 = arith.constant 0 : i32
    %c0_i32_0 = arith.constant 0 : i32
    return %arg0, %c0_i32 : i32, i32
  }
  func.func @transform_16(%arg0: i32) -> (i32, i32) {
    %c0_i32 = arith.constant 0 : i32
    %c0_i32_0 = arith.constant 0 : i32
    return %arg0, %c0_i32 : i32, i32
  }
  func.func @transform_17(%arg0: i32) -> (i32, i32) {
    %c0_i32 = arith.constant 0 : i32
    %c0_i32_0 = arith.constant 0 : i32
    return %arg0, %c0_i32 : i32, i32
  }
  func.func @transform_18(%arg0: i32) -> (i32, i32) {
    %c0_i32 = arith.constant 0 : i32
    %c0_i32_0 = arith.constant 0 : i32
    return %arg0, %c0_i32 : i32, i32
  }
}

</mosaic_0001>

<llo_original>
// kernel: decomposition_forward.1
$region0: #{decomposition_forward.1}
  #allocation0 [shape = 'u32[]', space=smem, size = 0x4, offset = 0x4, fixed_abs, tag = 'smem constant byte address 0x4 - core index']
  #allocation1 [shape = 'u32[144,128]{1,0:T(1,128)}', space=vmem, size = 0x12000, scoped, tag = 'internal scratch']
  %s0 = inlined_call_operand.vmem [shape: f32[16,32], index: 0, kind: input, shape index: {}]
  %s1 = inlined_call_operand.vmem [shape: f32[32,64], index: 1, kind: input, shape index: {}]
  %s2 = inlined_call_operand.vmem [shape: f32[1,64], index: 2, kind: input, shape index: {}]
  %s3 = inlined_call_operand.vmem [shape: f32[64,48], index: 3, kind: input, shape index: {}]
  %s4 = inlined_call_operand.vmem [shape: f32[1,48], index: 4, kind: input, shape index: {}]
  %s5 = inlined_call_operand.vmem [shape: f32[48,128], index: 5, kind: input, shape index: {}]
  %s6 = inlined_call_operand.vmem [shape: f32[1,128], index: 6, kind: input, shape index: {}]
  %s7 = inlined_call_operand.vmem [shape: f32[32,64], index: 7, kind: input, shape index: {}]
  %s8 = inlined_call_operand.vmem [shape: f32[1,64], index: 8, kind: input, shape index: {}]
  %s9 = inlined_call_operand.vmem [shape: f32[64,128], index: 9, kind: input, shape index: {}]
  %s10 = inlined_call_operand.vmem [shape: f32[1,128], index: 10, kind: input, shape index: {}]
  %s11 = inlined_call_operand.vmem [shape: f32[32,64], index: 11, kind: input, shape index: {}]
  %s12 = inlined_call_operand.vmem [shape: f32[1,64], index: 12, kind: input, shape index: {}]
  %s13 = inlined_call_operand.vmem [shape: f32[64,128], index: 13, kind: input, shape index: {}]
  %s14 = inlined_call_operand.vmem [shape: f32[1,128], index: 14, kind: input, shape index: {}]
  %s15 = inlined_call_operand.hbm [shape: f32[16,128], index: 15, kind: output, shape index: {0}]
  %s16 = inlined_call_operand.vmem [shape: f32[16,128], index: 16, kind: output, shape index: {1}]
  %s17 = inlined_call_operand.hbm [shape: f32[16,128], index: 17, kind: output, shape index: {2}]
  %s18 = inlined_call_operand.hbm [shape: f32[16,128], index: 18, kind: output, shape index: {3}]
  %19 = xla_tuple %s15, %s16, %s17, %s18
  %s20 = sld [smem:[#allocation0]]
  $region117: #{decomposition_forward.1} parent=0
    _
  %s22 = ssub.s32 1, %s20
  %s23 = scalar_select 0, %s22, %s20
  $region1: #{decomposition_forward.1} parent=0
    #allocation2 [shape = 'u8[8192]{0}', space=vmem, size = 0x2000, scoped, tag = 'output window, operand 0']
    #allocation3 [shape = 's32[2]{0}', space=sflag, size = 0x8, scoped, tag = 'scoped memory for decomposition_forward.1']
    #allocation4 [shape = 'u8[8192]{0}', space=vmem, size = 0x2000, scoped, tag = 'output window, operand 2']
    #allocation5 [shape = 's32[2]{0}', space=sflag, size = 0x8, scoped, tag = 'scoped memory for decomposition_forward.1']
    #allocation6 [shape = 'u8[8192]{0}', space=vmem, size = 0x2000, scoped, tag = 'output window, operand 3']
    %24 = vsyncpa [#allocation3], 0
    %s25 = scalar_lea.sflag [#allocation3], 1
    %26 = vsyncpa %s25, 0
    %27 = vsyncpa [#allocation5], 0
    %s28 = scalar_lea.sflag [#allocation5], 1
    %29 = vsyncpa %s28, 0
    loop: start=0, step=1, limit=4
    $region2: #{decomposition_forward.1} parent=1 // loop_pre_header
      _
    $region3: #{decomposition_forward.1} parent=1 // loop_header
      %s31 = sphi 0, %s35
      %p32 = scmp.ge.s32.totalorder %s31, 4
      %s41 = sphi 0, %s43
      %s44 = sphi 0, %s41
      %s45 = sphi 0, %s44
      %s61 = sphi 0, %s45
      %s65 = sphi 0, %s65
      %s67 = sphi 0, %s65
      %s68 = sphi 0, %s67
      %s82 = sphi 0, %s68
      %s86 = sphi 0, %s86
      %s88 = sphi 0, %s86
      %s89 = sphi 0, %s88
      %s103 = sphi 0, %s89
      %s107 = sphi 0, %s107
      %s109 = sphi 0, %s107
      %s110 = sphi 0, %s109
      %s124 = sphi 0, %s110
      %s128 = sphi 0, %s128
      %s130 = sphi 0, %s128
      %s131 = sphi 0, %s130
      %s145 = sphi 0, %s131
      %s149 = sphi 0, %s149
      %s151 = sphi 0, %s149
      %s152 = sphi 0, %s151
      %s166 = sphi 0, %s152
      %s170 = sphi 0, %s170
      %s172 = sphi 0, %s170
      %s173 = sphi 0, %s172
      %s187 = sphi 0, %s173
      %s191 = sphi 0, %s191
      %s193 = sphi 0, %s191
      %s194 = sphi 0, %s193
      %s208 = sphi 0, %s194
      %s212 = sphi 0, %s212
      %s214 = sphi 0, %s212
      %s215 = sphi 0, %s214
      %s229 = sphi 0, %s215
      %s233 = sphi 0, %s233
      %s235 = sphi 0, %s233
      %s236 = sphi 0, %s235
      %s250 = sphi 0, %s236
      %s254 = sphi 0, %s254
      %s256 = sphi 0, %s254
      %s257 = sphi 0, %s256
      %s271 = sphi 0, %s257
      %s275 = sphi 0, %s275
      %s277 = sphi 0, %s275
      %s278 = sphi 0, %s277
      %s292 = sphi 0, %s278
      %s296 = sphi 0, %s296
      %s298 = sphi 0, %s296
      %s299 = sphi 0, %s298
      %s313 = sphi 0, %s299
      %s317 = sphi 0, %s317
      %s319 = sphi 0, %s317
      %s320 = sphi 0, %s319
      %s334 = sphi 0, %s320
      %s338 = sphi 0, %s338
      %s340 = sphi 0, %s338
      %s341 = sphi 0, %s340
      %s355 = sphi 0, %s341
      %s361 = sphi 0, %s363
      %s364 = sphi 0, %s361
      %s365 = sphi 0, %s364
      %s381 = sphi 0, %s365
      %s387 = sphi 0, %s389
      %s390 = sphi 0, %s387
      %s391 = sphi 0, %s390
      %s407 = sphi 0, %s391
      %s413 = sphi 0, %s415
      %s416 = sphi 0, %s413
      %s417 = sphi 0, %s416
      %s433 = sphi 0, %s417
      %s439 = sphi 0, %s441
      %s442 = sphi 0, %s439
      %s443 = sphi 0, %s442
      %s459 = sphi 0, %s443
    $region4: #{decomposition_forward.1} parent=1 // loop_header_branch
      %34 = sbr.rel (%p32) target = $region8
    $region5: #{decomposition_forward.1} parent=1 // loop_body
      %s36 = ssub.s32 %s31, 1
      %s37 = ssub.s32 %s31, 2
      %s38 = sadd.s32 %s31, 1
      %s39 = ssub.s32 %s31, %s38
      %p40 = scmp.eq.s32.totalorder %s39, 0
      %s42 = sadd.s32 %s41, 1
      %s43 = scalar_select %p40, %s41, %s42
      %p46 = pneg %p40
      %p47 = scmp.eq.s32.totalorder %s31, 1
      %p48 = por %p46, %p47
      %p49 = scmp.ne.s32.totalorder %s41, %s44
      %p50 = scmp.eq.s32.totalorder %s31, 0
      %p51 = por %p49, %p50
      %p52 = scmp.ne.s32.totalorder %s41, %s44
      %p53 = scmp.eq.s32.totalorder %s36, 1
      %p54 = por %p52, %p53
      %p55 = scmp.ne.s32.totalorder %s44, %s45
      %p56 = scmp.eq.s32.totalorder %s36, 0
      %p57 = por %p55, %p56
      %p58 = scmp.ne.s32.totalorder %s44, %s45
      %p59 = scmp.eq.s32.totalorder %s37, 1
      %p60 = por %p58, %p59
      %p62 = scmp.ne.s32.totalorder %s45, %s61
      %p63 = scmp.eq.s32.totalorder %s37, 0
      %p64 = por %p62, %p63
      %s66 = sadd.s32 %s65, 1
      %p69 = scmp.eq.s32.totalorder %s31, 1
      %p70 = scmp.ne.s32.totalorder %s65, %s67
      %p71 = scmp.eq.s32.totalorder %s31, 0
      %p72 = por %p70, %p71
      %p73 = scmp.ne.s32.totalorder %s65, %s67
      %p74 = scmp.eq.s32.totalorder %s36, 1
      %p75 = por %p73, %p74
      %p76 = scmp.ne.s32.totalorder %s67, %s68
      %p77 = scmp.eq.s32.totalorder %s36, 0
      %p78 = por %p76, %p77
      %p79 = scmp.ne.s32.totalorder %s67, %s68
      %p80 = scmp.eq.s32.totalorder %s37, 1
      %p81 = por %p79, %p80
      %p83 = scmp.ne.s32.totalorder %s68, %s82
      %p84 = scmp.eq.s32.totalorder %s37, 0
      %p85 = por %p83, %p84
      %s87 = sadd.s32 %s86, 1
      %p90 = scmp.eq.s32.totalorder %s31, 1
      %p91 = scmp.ne.s32.totalorder %s86, %s88
      %p92 = scmp.eq.s32.totalorder %s31, 0
      %p93 = por %p91, %p92
      %p94 = scmp.ne.s32.totalorder %s86, %s88
      %p95 = scmp.eq.s32.totalorder %s36, 1
      %p96 = por %p94, %p95
      %p97 = scmp.ne.s32.totalorder %s88, %s89
      %p98 = scmp.eq.s32.totalorder %s36, 0
      %p99 = por %p97, %p98
      %p100 = scmp.ne.s32.totalorder %s88, %s89
      %p101 = scmp.eq.s32.totalorder %s37, 1
      %p102 = por %p100, %p101
      %p104 = scmp.ne.s32.totalorder %s89, %s103
      %p105 = scmp.eq.s32.totalorder %s37, 0
      %p106 = por %p104, %p105
      %s108 = sadd.s32 %s107, 1
      %p111 = scmp.eq.s32.totalorder %s31, 1
      %p112 = scmp.ne.s32.totalorder %s107, %s109
      %p113 = scmp.eq.s32.totalorder %s31, 0
      %p114 = por %p112, %p113
      %p115 = scmp.ne.s32.totalorder %s107, %s109
      %p116 = scmp.eq.s32.totalorder %s36, 1
      %p117 = por %p115, %p116
      %p118 = scmp.ne.s32.totalorder %s109, %s110
      %p119 = scmp.eq.s32.totalorder %s36, 0
      %p120 = por %p118, %p119
      %p121 = scmp.ne.s32.totalorder %s109, %s110
      %p122 = scmp.eq.s32.totalorder %s37, 1
      %p123 = por %p121, %p122
      %p125 = scmp.ne.s32.totalorder %s110, %s124
      %p126 = scmp.eq.s32.totalorder %s37, 0
      %p127 = por %p125, %p126
      %s129 = sadd.s32 %s128, 1
      %p132 = scmp.eq.s32.totalorder %s31, 1
      %p133 = scmp.ne.s32.totalorder %s128, %s130
      %p134 = scmp.eq.s32.totalorder %s31, 0
      %p135 = por %p133, %p134
      %p136 = scmp.ne.s32.totalorder %s128, %s130
      %p137 = scmp.eq.s32.totalorder %s36, 1
      %p138 = por %p136, %p137
      %p139 = scmp.ne.s32.totalorder %s130, %s131
      %p140 = scmp.eq.s32.totalorder %s36, 0
      %p141 = por %p139, %p140
      %p142 = scmp.ne.s32.totalorder %s130, %s131
      %p143 = scmp.eq.s32.totalorder %s37, 1
      %p144 = por %p142, %p143
      %p146 = scmp.ne.s32.totalorder %s131, %s145
      %p147 = scmp.eq.s32.totalorder %s37, 0
      %p148 = por %p146, %p147
      %s150 = sadd.s32 %s149, 1
      %p153 = scmp.eq.s32.totalorder %s31, 1
      %p154 = scmp.ne.s32.totalorder %s149, %s151
      %p155 = scmp.eq.s32.totalorder %s31, 0
      %p156 = por %p154, %p155
      %p157 = scmp.ne.s32.totalorder %s149, %s151
      %p158 = scmp.eq.s32.totalorder %s36, 1
      %p159 = por %p157, %p158
      %p160 = scmp.ne.s32.totalorder %s151, %s152
      %p161 = scmp.eq.s32.totalorder %s36, 0
      %p162 = por %p160, %p161
      %p163 = scmp.ne.s32.totalorder %s151, %s152
      %p164 = scmp.eq.s32.totalorder %s37, 1
      %p165 = por %p163, %p164
      %p167 = scmp.ne.s32.totalorder %s152, %s166
      %p168 = scmp.eq.s32.totalorder %s37, 0
      %p169 = por %p167, %p168
      %s171 = sadd.s32 %s170, 1
      %p174 = scmp.eq.s32.totalorder %s31, 1
      %p175 = scmp.ne.s32.totalorder %s170, %s172
      %p176 = scmp.eq.s32.totalorder %s31, 0
      %p177 = por %p175, %p176
      %p178 = scmp.ne.s32.totalorder %s170, %s172
      %p179 = scmp.eq.s32.totalorder %s36, 1
      %p180 = por %p178, %p179
      %p181 = scmp.ne.s32.totalorder %s172, %s173
      %p182 = scmp.eq.s32.totalorder %s36, 0
      %p183 = por %p181, %p182
      %p184 = scmp.ne.s32.totalorder %s172, %s173
      %p185 = scmp.eq.s32.totalorder %s37, 1
      %p186 = por %p184, %p185
      %p188 = scmp.ne.s32.totalorder %s173, %s187
      %p189 = scmp.eq.s32.totalorder %s37, 0
      %p190 = por %p188, %p189
      %s192 = sadd.s32 %s191, 1
      %p195 = scmp.eq.s32.totalorder %s31, 1
      %p196 = scmp.ne.s32.totalorder %s191, %s193
      %p197 = scmp.eq.s32.totalorder %s31, 0
      %p198 = por %p196, %p197
      %p199 = scmp.ne.s32.totalorder %s191, %s193
      %p200 = scmp.eq.s32.totalorder %s36, 1
      %p201 = por %p199, %p200
      %p202 = scmp.ne.s32.totalorder %s193, %s194
      %p203 = scmp.eq.s32.totalorder %s36, 0
      %p204 = por %p202, %p203
      %p205 = scmp.ne.s32.totalorder %s193, %s194
      %p206 = scmp.eq.s32.totalorder %s37, 1
      %p207 = por %p205, %p206
      %p209 = scmp.ne.s32.totalorder %s194, %s208
      %p210 = scmp.eq.s32.totalorder %s37, 0
      %p211 = por %p209, %p210
      %s213 = sadd.s32 %s212, 1
      %p216 = scmp.eq.s32.totalorder %s31, 1
      %p217 = scmp.ne.s32.totalorder %s212, %s214
      %p218 = scmp.eq.s32.totalorder %s31, 0
      %p219 = por %p217, %p218
      %p220 = scmp.ne.s32.totalorder %s212, %s214
      %p221 = scmp.eq.s32.totalorder %s36, 1
      %p222 = por %p220, %p221
      %p223 = scmp.ne.s32.totalorder %s214, %s215
      %p224 = scmp.eq.s32.totalorder %s36, 0
      %p225 = por %p223, %p224
      %p226 = scmp.ne.s32.totalorder %s214, %s215
      %p227 = scmp.eq.s32.totalorder %s37, 1
      %p228 = por %p226, %p227
      %p230 = scmp.ne.s32.totalorder %s215, %s229
      %p231 = scmp.eq.s32.totalorder %s37, 0
      %p232 = por %p230, %p231
      %s234 = sadd.s32 %s233, 1
      %p237 = scmp.eq.s32.totalorder %s31, 1
      %p238 = scmp.ne.s32.totalorder %s233, %s235
      %p239 = scmp.eq.s32.totalorder %s31, 0
      %p240 = por %p238, %p239
      %p241 = scmp.ne.s32.totalorder %s233, %s235
      %p242 = scmp.eq.s32.totalorder %s36, 1
      %p243 = por %p241, %p242
      %p244 = scmp.ne.s32.totalorder %s235, %s236
      %p245 = scmp.eq.s32.totalorder %s36, 0
      %p246 = por %p244, %p245
      %p247 = scmp.ne.s32.totalorder %s235, %s236
      %p248 = scmp.eq.s32.totalorder %s37, 1
      %p249 = por %p247, %p248
      %p251 = scmp.ne.s32.totalorder %s236, %s250
      %p252 = scmp.eq.s32.totalorder %s37, 0
      %p253 = por %p251, %p252
      %s255 = sadd.s32 %s254, 1
      %p258 = scmp.eq.s32.totalorder %s31, 1
      %p259 = scmp.ne.s32.totalorder %s254, %s256
      %p260 = scmp.eq.s32.totalorder %s31, 0
      %p261 = por %p259, %p260
      %p262 = scmp.ne.s32.totalorder %s254, %s256
      %p263 = scmp.eq.s32.totalorder %s36, 1
      %p264 = por %p262, %p263
      %p265 = scmp.ne.s32.totalorder %s256, %s257
      %p266 = scmp.eq.s32.totalorder %s36, 0
      %p267 = por %p265, %p266
      %p268 = scmp.ne.s32.totalorder %s256, %s257
      %p269 = scmp.eq.s32.totalorder %s37, 1
      %p270 = por %p268, %p269
      %p272 = scmp.ne.s32.totalorder %s257, %s271
      %p273 = scmp.eq.s32.totalorder %s37, 0
      %p274 = por %p272, %p273
      %s276 = sadd.s32 %s275, 1
      %p279 = scmp.eq.s32.totalorder %s31, 1
      %p280 = scmp.ne.s32.totalorder %s275, %s277
      %p281 = scmp.eq.s32.totalorder %s31, 0
      %p282 = por %p280, %p281
      %p283 = scmp.ne.s32.totalorder %s275, %s277
      %p284 = scmp.eq.s32.totalorder %s36, 1
      %p285 = por %p283, %p284
      %p286 = scmp.ne.s32.totalorder %s277, %s278
      %p287 = scmp.eq.s32.totalorder %s36, 0
      %p288 = por %p286, %p287
      %p289 = scmp.ne.s32.totalorder %s277, %s278
      %p290 = scmp.eq.s32.totalorder %s37, 1
      %p291 = por %p289, %p290
      %p293 = scmp.ne.s32.totalorder %s278, %s292
      %p294 = scmp.eq.s32.totalorder %s37, 0
      %p295 = por %p293, %p294
      %s297 = sadd.s32 %s296, 1
      %p300 = scmp.eq.s32.totalorder %s31, 1
      %p301 = scmp.ne.s32.totalorder %s296, %s298
      %p302 = scmp.eq.s32.totalorder %s31, 0
      %p303 = por %p301, %p302
      %p304 = scmp.ne.s32.totalorder %s296, %s298
      %p305 = scmp.eq.s32.totalorder %s36, 1
      %p306 = por %p304, %p305
      %p307 = scmp.ne.s32.totalorder %s298, %s299
      %p308 = scmp.eq.s32.totalorder %s36, 0
      %p309 = por %p307, %p308
      %p310 = scmp.ne.s32.totalorder %s298, %s299
      %p311 = scmp.eq.s32.totalorder %s37, 1
      %p312 = por %p310, %p311
      %p314 = scmp.ne.s32.totalorder %s299, %s313
      %p315 = scmp.eq.s32.totalorder %s37, 0
      %p316 = por %p314, %p315
      %s318 = sadd.s32 %s317, 1
      %p321 = scmp.eq.s32.totalorder %s31, 1
      %p322 = scmp.ne.s32.totalorder %s317, %s319
      %p323 = scmp.eq.s32.totalorder %s31, 0
      %p324 = por %p322, %p323
      %p325 = scmp.ne.s32.totalorder %s317, %s319
      %p326 = scmp.eq.s32.totalorder %s36, 1
      %p327 = por %p325, %p326
      %p328 = scmp.ne.s32.totalorder %s319, %s320
      %p329 = scmp.eq.s32.totalorder %s36, 0
      %p330 = por %p328, %p329
      %p331 = scmp.ne.s32.totalorder %s319, %s320
      %p332 = scmp.eq.s32.totalorder %s37, 1
      %p333 = por %p331, %p332
      %p335 = scmp.ne.s32.totalorder %s320, %s334
      %p336 = scmp.eq.s32.totalorder %s37, 0
      %p337 = por %p335, %p336
      %s339 = sadd.s32 %s338, 1
      %p342 = scmp.eq.s32.totalorder %s31, 1
      %p343 = scmp.ne.s32.totalorder %s338, %s340
      %p344 = scmp.eq.s32.totalorder %s31, 0
      %p345 = por %p343, %p344
      %p346 = scmp.ne.s32.totalorder %s338, %s340
      %p347 = scmp.eq.s32.totalorder %s36, 1
      %p348 = por %p346, %p347
      %p349 = scmp.ne.s32.totalorder %s340, %s341
      %p350 = scmp.eq.s32.totalorder %s36, 0
      %p351 = por %p349, %p350
      %p352 = scmp.ne.s32.totalorder %s340, %s341
      %p353 = scmp.eq.s32.totalorder %s37, 1
      %p354 = por %p352, %p353
      %p356 = scmp.ne.s32.totalorder %s341, %s355
      %p357 = scmp.eq.s32.totalorder %s37, 0
      %p358 = por %p356, %p357
      %s359 = ssub.s32 %s31, %s38
      %p360 = scmp.eq.s32.totalorder %s359, 0
      %s362 = sadd.s32 %s361, 1
      %s363 = scalar_select %p360, %s361, %s362
      %p366 = pneg %p360
      %p367 = scmp.eq.s32.totalorder %s31, 1
      %p368 = por %p366, %p367
      %p369 = scmp.ne.s32.totalorder %s361, %s364
      %p370 = scmp.eq.s32.totalorder %s31, 0
      %p371 = por %p369, %p370
      %p372 = scmp.ne.s32.totalorder %s361, %s364
      %p373 = scmp.eq.s32.totalorder %s36, 1
      %p374 = por %p372, %p373
      %p375 = scmp.ne.s32.totalorder %s364, %s365
      %p376 = scmp.eq.s32.totalorder %s36, 0
      %p377 = por %p375, %p376
      %p378 = scmp.ne.s32.totalorder %s364, %s365
      %p379 = scmp.eq.s32.totalorder %s37, 1
      %p380 = por %p378, %p379
      %p382 = scmp.ne.s32.totalorder %s365, %s381
      %p383 = scmp.eq.s32.totalorder %s37, 0
      %p384 = por %p382, %p383
      %s385 = ssub.s32 %s31, %s38
      %p386 = scmp.eq.s32.totalorder %s385, 0
      %s388 = sadd.s32 %s387, 1
      %s389 = scalar_select %p386, %s387, %s388
      %p392 = pneg %p386
      %p393 = scmp.eq.s32.totalorder %s31, 1
      %p394 = por %p392, %p393
      %p395 = scmp.ne.s32.totalorder %s387, %s390
      %p396 = scmp.eq.s32.totalorder %s31, 0
      %p397 = por %p395, %p396
      %p398 = scmp.ne.s32.totalorder %s387, %s390
      %p399 = scmp.eq.s32.totalorder %s36, 1
      %p400 = por %p398, %p399
      %p401 = scmp.ne.s32.totalorder %s390, %s391
      %p402 = scmp.eq.s32.totalorder %s36, 0
      %p403 = por %p401, %p402
      %p404 = scmp.ne.s32.totalorder %s390, %s391
      %p405 = scmp.eq.s32.totalorder %s37, 1
      %p406 = por %p404, %p405
      %p408 = scmp.ne.s32.totalorder %s391, %s407
      %p409 = scmp.eq.s32.totalorder %s37, 0
      %p410 = por %p408, %p409
      %s411 = ssub.s32 %s31, %s38
      %p412 = scmp.eq.s32.totalorder %s411, 0
      %s414 = sadd.s32 %s413, 1
      %s415 = scalar_select %p412, %s413, %s414
      %p418 = pneg %p412
      %p419 = scmp.eq.s32.totalorder %s31, 1
      %p420 = por %p418, %p419
      %p421 = scmp.ne.s32.totalorder %s413, %s416
      %p422 = scmp.eq.s32.totalorder %s31, 0
      %p423 = por %p421, %p422
      %p424 = scmp.ne.s32.totalorder %s413, %s416
      %p425 = scmp.eq.s32.totalorder %s36, 1
      %p426 = por %p424, %p425
      %p427 = scmp.ne.s32.totalorder %s416, %s417
      %p428 = scmp.eq.s32.totalorder %s36, 0
      %p429 = por %p427, %p428
      %p430 = scmp.ne.s32.totalorder %s416, %s417
      %p431 = scmp.eq.s32.totalorder %s37, 1
      %p432 = por %p430, %p431
      %p434 = scmp.ne.s32.totalorder %s417, %s433
      %p435 = scmp.eq.s32.totalorder %s37, 0
      %p436 = por %p434, %p435
      %s437 = ssub.s32 %s31, %s38
      %p438 = scmp.eq.s32.totalorder %s437, 0
      %s440 = sadd.s32 %s439, 1
      %s441 = scalar_select %p438, %s439, %s440
      %p444 = pneg %p438
      %p445 = scmp.eq.s32.totalorder %s31, 1
      %p446 = por %p444, %p445
      %p447 = scmp.ne.s32.totalorder %s439, %s442
      %p448 = scmp.eq.s32.totalorder %s31, 0
      %p449 = por %p447, %p448
      %p450 = scmp.ne.s32.totalorder %s439, %s442
      %p451 = scmp.eq.s32.totalorder %s36, 1
      %p452 = por %p450, %p451
      %p453 = scmp.ne.s32.totalorder %s442, %s443
      %p454 = scmp.eq.s32.totalorder %s36, 0
      %p455 = por %p453, %p454
      %p456 = scmp.ne.s32.totalorder %s442, %s443
      %p457 = scmp.eq.s32.totalorder %s37, 1
      %p458 = por %p456, %p457
      %p460 = scmp.ne.s32.totalorder %s443, %s459
      %p461 = scmp.eq.s32.totalorder %s37, 0
      %p462 = por %p460, %p461
      %p463 = scmp.le.s32.totalorder 1, %s31
      %p464 = scmp.lt.s32.totalorder %s31, 3
      %p465 = pnand %p463, %p464
      %p466 = pneg %p465
      // Predicated region
      $region9: #{decomposition_forward.1} parent=5 // pred_check
        _
      $region10: #{decomposition_forward.1} parent=5 // pred_check_branch
        %468 = sbr.rel (%p465) target = $region12
      $region11: #{decomposition_forward.1} parent=5 // pred_region
        %s469 = ssub.s32 %s31, 1
        // Predicated region
        $region13: #{decomposition_forward.1} parent=11 // pred_check
          %p470 = pneg %p78
        $region14: #{decomposition_forward.1} parent=11 // pred_check_branch
          %472 = sbr.rel (%p470) target = $region16
        $region15: #{decomposition_forward.1} parent=11 // pred_region
          _
        $region16: #{decomposition_forward.1} parent=11 // pred_fallthru
          _
        // Predicated region
        $region17: #{decomposition_forward.1} parent=11 // pred_check
          %p473 = pneg %p99
        $region18: #{decomposition_forward.1} parent=11 // pred_check_branch
          %475 = sbr.rel (%p473) target = $region20
        $region19: #{decomposition_forward.1} parent=11 // pred_region
          _
        $region20: #{decomposition_forward.1} parent=11 // pred_fallthru
          _
        // Predicated region
        $region21: #{decomposition_forward.1} parent=11 // pred_check
          %p476 = pneg %p120
        $region22: #{decomposition_forward.1} parent=11 // pred_check_branch
          %478 = sbr.rel (%p476) target = $region24
        $region23: #{decomposition_forward.1} parent=11 // pred_region
          _
        $region24: #{decomposition_forward.1} parent=11 // pred_fallthru
          _
        // Predicated region
        $region25: #{decomposition_forward.1} parent=11 // pred_check
          %p479 = pneg %p141
        $region26: #{decomposition_forward.1} parent=11 // pred_check_branch
          %481 = sbr.rel (%p479) target = $region28
        $region27: #{decomposition_forward.1} parent=11 // pred_region
          _
        $region28: #{decomposition_forward.1} parent=11 // pred_fallthru
          _
        // Predicated region
        $region29: #{decomposition_forward.1} parent=11 // pred_check
          %p482 = pneg %p162
        $region30: #{decomposition_forward.1} parent=11 // pred_check_branch
          %484 = sbr.rel (%p482) target = $region32
        $region31: #{decomposition_forward.1} parent=11 // pred_region
          _
        $region32: #{decomposition_forward.1} parent=11 // pred_fallthru
          _
        // Predicated region
        $region33: #{decomposition_forward.1} parent=11 // pred_check
          %p485 = pneg %p183
        $region34: #{decomposition_forward.1} parent=11 // pred_check_branch
          %487 = sbr.rel (%p485) target = $region36
        $region35: #{decomposition_forward.1} parent=11 // pred_region
          _
        $region36: #{decomposition_forward.1} parent=11 // pred_fallthru
          _
        // Predicated region
        $region37: #{decomposition_forward.1} parent=11 // pred_check
          %p488 = pneg %p204
        $region38: #{decomposition_forward.1} parent=11 // pred_check_branch
          %490 = sbr.rel (%p488) target = $region40
        $region39: #{decomposition_forward.1} parent=11 // pred_region
          _
        $region40: #{decomposition_forward.1} parent=11 // pred_fallthru
          _
        // Predicated region
        $region41: #{decomposition_forward.1} parent=11 // pred_check
          %p491 = pneg %p225
        $region42: #{decomposition_forward.1} parent=11 // pred_check_branch
          %493 = sbr.rel (%p491) target = $region44
        $region43: #{decomposition_forward.1} parent=11 // pred_region
          _
        $region44: #{decomposition_forward.1} parent=11 // pred_fallthru
          _
        // Predicated region
        $region45: #{decomposition_forward.1} parent=11 // pred_check
          %p494 = pneg %p246
        $region46: #{decomposition_forward.1} parent=11 // pred_check_branch
          %496 = sbr.rel (%p494) target = $region48
        $region47: #{decomposition_forward.1} parent=11 // pred_region
          _
        $region48: #{decomposition_forward.1} parent=11 // pred_fallthru
          _
        // Predicated region
        $region49: #{decomposition_forward.1} parent=11 // pred_check
          %p497 = pneg %p267
        $region50: #{decomposition_forward.1} parent=11 // pred_check_branch
          %499 = sbr.rel (%p497) target = $region52
        $region51: #{decomposition_forward.1} parent=11 // pred_region
          _
        $region52: #{decomposition_forward.1} parent=11 // pred_fallthru
          _
        // Predicated region
        $region53: #{decomposition_forward.1} parent=11 // pred_check
          %p500 = pneg %p288
        $region54: #{decomposition_forward.1} parent=11 // pred_check_branch
          %502 = sbr.rel (%p500) target = $region56
        $region55: #{decomposition_forward.1} parent=11 // pred_region
          _
        $region56: #{decomposition_forward.1} parent=11 // pred_fallthru
          _
        // Predicated region
        $region57: #{decomposition_forward.1} parent=11 // pred_check
          %p503 = pneg %p309
        $region58: #{decomposition_forward.1} parent=11 // pred_check_branch
          %505 = sbr.rel (%p503) target = $region60
        $region59: #{decomposition_forward.1} parent=11 // pred_region
          _
        $region60: #{decomposition_forward.1} parent=11 // pred_fallthru
          _
        // Predicated region
        $region61: #{decomposition_forward.1} parent=11 // pred_check
          %p506 = pneg %p330
        $region62: #{decomposition_forward.1} parent=11 // pred_check_branch
          %508 = sbr.rel (%p506) target = $region64
        $region63: #{decomposition_forward.1} parent=11 // pred_region
          _
        $region64: #{decomposition_forward.1} parent=11 // pred_fallthru
          _
        // Predicated region
        $region65: #{decomposition_forward.1} parent=11 // pred_check
          %p509 = pneg %p351
        $region66: #{decomposition_forward.1} parent=11 // pred_check_branch
          %511 = sbr.rel (%p509) target = $region68
        $region67: #{decomposition_forward.1} parent=11 // pred_region
          _
        $region68: #{decomposition_forward.1} parent=11 // pred_fallthru
          _
      $region12: #{decomposition_forward.1} parent=5 // pred_fallthru
        _
      %p512 = scmp.lt.s32.totalorder %s31, 2
      // Predicated region
      $region69: #{decomposition_forward.1} parent=5 // pred_check
        %p513 = pneg %p512
      $region70: #{decomposition_forward.1} parent=5 // pred_check_branch
        %515 = sbr.rel (%p513) target = $region72
      $region71: #{decomposition_forward.1} parent=5 // pred_region
        // Predicated region
        $region73: #{decomposition_forward.1} parent=71 // pred_check
          %p516 = pneg %p51
        $region74: #{decomposition_forward.1} parent=71 // pred_check_branch
          %518 = sbr.rel (%p516) target = $region76
        $region75: #{decomposition_forward.1} parent=71 // pred_region
          %p519 = scmp.lt.s32.totalorder %s31, 1
          %s520 = scalar_select %p519, %s31, 1
          %s521 = smul.addr %s520, 8
          %s522 = scalar_lea.vmem %s0, %s521
        $region76: #{decomposition_forward.1} parent=71 // pred_fallthru
          _
      $region72: #{decomposition_forward.1} parent=5 // pred_fallthru
        _
      %p523 = scmp.le.s32.totalorder 1, %s31
      %p524 = scmp.lt.s32.totalorder %s31, 3
      %p525 = pnand %p523, %p524
      %p526 = pneg %p525
      // Predicated region
      $region77: #{decomposition_forward.1} parent=5 // pred_check
        _
      $region78: #{decomposition_forward.1} parent=5 // pred_check_branch
        %528 = sbr.rel (%p525) target = $region80
      $region79: #{decomposition_forward.1} parent=5 // pred_region
        %s529 = ssub.s32 %s31, 1
        %p530 = scmp.lt.s32.totalorder %s36, 1
        %s531 = scalar_select %p530, %s36, 1
        %s532 = smul.addr %s531, 8
        %s533 = scalar_lea.vmem %s0, %s532
        %p534 = pneg %p57
        %p535 = pneg %p54
        %p536 = pneg %p78
        %p537 = pneg %p75
        %p538 = pneg %p99
        %p539 = pneg %p96
        %p540 = pneg %p120
        %p541 = pneg %p117
        %p542 = pneg %p141
        %p543 = pneg %p138
        %p544 = pneg %p162
        %p545 = pneg %p159
        %p546 = pneg %p183
        %p547 = pneg %p180
        %p548 = pneg %p204
        %p549 = pneg %p201
        %p550 = pneg %p225
        %p551 = pneg %p222
        %p552 = pneg %p246
        %p553 = pneg %p243
        %p554 = pneg %p267
        %p555 = pneg %p264
        %p556 = pneg %p288
        %p557 = pneg %p285
        %p558 = pneg %p309
        %p559 = pneg %p306
        %p560 = pneg %p330
        %p561 = pneg %p327
        %p562 = pneg %p351
        %p563 = pneg %p348
        %p564 = pneg %p377
        %p565 = pneg %p374
        %s566 = sand.u32 %s364, 1
        %s567 = scalar_lea.sflag [#allocation3], %s566
        %s568 = sand.u32 %s364, 1
        %s569 = smul.addr %s568, 8
        %s570 = scalar_lea.vmem [#allocation2], %s569
        %p571 = pneg %p403
        %p572 = pneg %p400
        %p573 = scmp.lt.s32.totalorder %s36, 1
        %s574 = scalar_select %p573, %s36, 1
        %s575 = smul.addr %s574, 8
        %s576 = scalar_lea.vmem %s16, %s575
        %p577 = pneg %p429
        %p578 = pneg %p426
        %s579 = sand.u32 %s36, 1
        %s580 = scalar_lea.sflag [#allocation5], %s579
        %s581 = sand.u32 %s416, 1
        %s582 = smul.addr %s581, 8
        %s583 = scalar_lea.vmem [#allocation4], %s582
        %p584 = pneg %p455
        %p585 = pneg %p452
        %s586 = sand.u32 %s36, 1
        %s587 = scalar_lea.sflag [#allocation5], %s586
        %s588 = sand.u32 %s442, 1
        %s589 = smul.addr %s588, 8
        %s590 = scalar_lea.vmem [#allocation6], %s589
        %p591 = scmp.lt.s32.totalorder %s36, 1
        %s592 = scalar_select %p591, %s36, 1
        %s593 = smul.addr %s592, 8
        %s594 = scalar_lea.vmem %s0, %s593
        %p595 = scmp.lt.s32.totalorder %s36, 1
        %s596 = scalar_select %p595, %s36, 1
        %s597 = smul.addr %s596, 8
        %s598 = scalar_lea.vmem %s16, %s597
        %v599 = vld [vmem:[%s594] sm:$0xff]
        %v600 = vld [vmem:[%s1] sm:$0xff]
        %v601 = vld [vmem:[%s1 + $0x8] sm:$0xff]
        %v602 = vld [vmem:[%s1 + $0x10] sm:$0xff]
        %v603 = vld [vmem:[%s1 + $0x18] sm:$0xff]
        %v604 = vld [vmem:[%s2] sm:$0x1]
        %v606 = vlaneseq
        %v607 = vshrl.u32 %v606, 7
        %v608 = vsub.s32 0, %v607
        %v609 = vrot.slane %v604, %v608
        %vm611 = vcmask 261120
        %v613 = vsel %vm611, %v599, 0
        %615 = vmatprep.subr.mxu0 0.0
        %616 = vmatpush1.msra.mxu0 0.0
        %617 = vmatprep.subr.mxu0 0.0
        %618 = vmatpush1.msra.mxu0 0.0
        %619 = vmatprep.subr.mxu0 0.0
        %620 = vmatpush1.msra.mxu0 0.0
        %621 = vmatprep.subr.mxu0 0.0
        %622 = vmatpush1.msra.mxu0 0.0
        %623 = vmatprep.subr.mxu0 0.0
        %624 = vmatpush1.msra.mxu0 0.0
        %625 = vmatprep.subr.mxu0 0.0
        %626 = vmatpush1.msra.mxu0 0.0
        %627 = vmatprep.subr.mxu0 0.0
        %628 = vmatpush1.msra.mxu0 0.0
        %629 = vmatprep.subr.mxu0 0.0
        %630 = vmatpush1.msra.mxu0 0.0
        %631 = vmatprep.subr.mxu0 0.0
        %632 = vmatpush1.msra.mxu0 0.0
        %633 = vmatprep.subr.mxu0 0.0
        %634 = vmatpush1.msra.mxu0 0.0
        %635 = vmatprep.subr.mxu0 0.0
        %636 = vmatpush1.msra.mxu0 0.0
        %637 = vmatprep.subr.mxu0 0.0
        %638 = vmatpush1.msra.mxu0 0.0
        %639 = vmatprep.subr.mxu0 0.0
        %640 = vmatpush1.msra.mxu0 %v603
        %641 = vmatprep.subr.mxu0 0.0
        %642 = vmatpush1.msra.mxu0 %v602
        %643 = vmatprep.subr.mxu0 0.0
        %644 = vmatpush1.msra.mxu0 %v601
        %645 = vmatprep.subr.mxu0 0.0
        %646 = vmatpush1.msra.mxu0 %v600
        %647 = vmatprep.subr.mxu0 0.0
        %648 = vmatpush2.msra.mxu0 0.0
        %649 = vmatprep.subr.mxu0 0.0
        %650 = vmatpush2.msra.mxu0 0.0
        %651 = vmatprep.subr.mxu0 0.0
        %652 = vmatpush2.msra.mxu0 0.0
        %653 = vmatprep.subr.mxu0 0.0
        %654 = vmatpush2.msra.mxu0 0.0
        %655 = vmatprep.subr.mxu0 0.0
        %656 = vmatpush2.msra.mxu0 0.0
        %657 = vmatprep.subr.mxu0 0.0
        %658 = vmatpush2.msra.mxu0 0.0
        %659 = vmatprep.subr.mxu0 0.0
        %660 = vmatpush2.msra.mxu0 0.0
        %661 = vmatprep.subr.mxu0 0.0
        %662 = vmatpush2.msra.mxu0 0.0
        %663 = vmatprep.subr.mxu0 0.0
        %664 = vmatpush2.msra.mxu0 0.0
        %665 = vmatprep.subr.mxu0 0.0
        %666 = vmatpush2.msra.mxu0 0.0
        %667 = vmatprep.subr.mxu0 0.0
        %668 = vmatpush2.msra.mxu0 0.0
        %669 = vmatprep.subr.mxu0 0.0
        %670 = vmatpush2.msra.mxu0 0.0
        %671 = vmatprep.subr.mxu0 0.0
        %672 = vmatpush2.msra.mxu0 0.0
        %673 = vmatprep.subr.mxu0 0.0
        %674 = vmatpush2.msra.mxu0 0.0
        %675 = vmatprep.subr.mxu0 0.0
        %676 = vmatpush2.msra.mxu0 0.0
        %677 = vmatprep.subr.mxu0 0.0
        %678 = vmatpush2.msra.mxu0 0.0
        %679 = vmatprep.mubr.f32.mxu0 0.0
        %680 = vmatmul.mubr.f32.gmra.mxu0 %v613
        %v681 = vpop.f32.mrf.mxu0
        %v682 = vadd.f32 %v609, %v681
        %v683 = vpop.f32.mrf.mxu0
        %684 = vdwg.mxu0
        %v685 = vmax.f32 %v682, 0.0
        %v686 = vld [vmem:[%s3] sm:$0xff]
        %v687 = vld [vmem:[%s3 + $0x8] sm:$0xff]
        %v688 = vld [vmem:[%s3 + $0x10] sm:$0xff]
        %v689 = vld [vmem:[%s3 + $0x18] sm:$0xff]
        %v690 = vld [vmem:[%s3 + $0x20] sm:$0xff]
        %v691 = vld [vmem:[%s3 + $0x28] sm:$0xff]
        %v692 = vld [vmem:[%s3 + $0x30] sm:$0xff]
        %v693 = vld [vmem:[%s3 + $0x38] sm:$0xff]
        %v694 = vld [vmem:[%s4] sm:$0x1]
        %v696 = vlaneseq
        %v697 = vshrl.u32 %v696, 7
        %v698 = vsub.s32 0, %v697
        %v699 = vrot.slane %v694, %v698
        %vm701 = vcmask 523264
        %v703 = vsel %vm701, %v685, 0
        %705 = vmatprep.subr.mxu0 0.0
        %706 = vmatpush1.msra.mxu0 0.0
        %707 = vmatprep.subr.mxu0 0.0
        %708 = vmatpush1.msra.mxu0 0.0
        %709 = vmatprep.subr.mxu0 0.0
        %710 = vmatpush1.msra.mxu0 0.0
        %711 = vmatprep.subr.mxu0 0.0
        %712 = vmatpush1.msra.mxu0 0.0
        %713 = vmatprep.subr.mxu0 0.0
        %714 = vmatpush1.msra.mxu0 0.0
        %715 = vmatprep.subr.mxu0 0.0
        %716 = vmatpush1.msra.mxu0 0.0
        %717 = vmatprep.subr.mxu0 0.0
        %718 = vmatpush1.msra.mxu0 0.0
        %719 = vmatprep.subr.mxu0 0.0
        %720 = vmatpush1.msra.mxu0 0.0
        %721 = vmatprep.subr.mxu0 0.0
        %722 = vmatpush1.msra.mxu0 %v693
        %723 = vmatprep.subr.mxu0 0.0
        %724 = vmatpush1.msra.mxu0 %v692
        %725 = vmatprep.subr.mxu0 0.0
        %726 = vmatpush1.msra.mxu0 %v691
        %727 = vmatprep.subr.mxu0 0.0
        %728 = vmatpush1.msra.mxu0 %v690
        %729 = vmatprep.subr.mxu0 0.0
        %730 = vmatpush1.msra.mxu0 %v689
        %731 = vmatprep.subr.mxu0 0.0
        %732 = vmatpush1.msra.mxu0 %v688
        %733 = vmatprep.subr.mxu0 0.0
        %734 = vmatpush1.msra.mxu0 %v687
        %735 = vmatprep.subr.mxu0 0.0
        %736 = vmatpush1.msra.mxu0 %v686
        %737 = vmatprep.subr.mxu0 0.0
        %738 = vmatpush2.msra.mxu0 0.0
        %739 = vmatprep.subr.mxu0 0.0
        %740 = vmatpush2.msra.mxu0 0.0
        %741 = vmatprep.subr.mxu0 0.0
        %742 = vmatpush2.msra.mxu0 0.0
        %743 = vmatprep.subr.mxu0 0.0
        %744 = vmatpush2.msra.mxu0 0.0
        %745 = vmatprep.subr.mxu0 0.0
        %746 = vmatpush2.msra.mxu0 0.0
        %747 = vmatprep.subr.mxu0 0.0
        %748 = vmatpush2.msra.mxu0 0.0
        %749 = vmatprep.subr.mxu0 0.0
        %750 = vmatpush2.msra.mxu0 0.0
        %751 = vmatprep.subr.mxu0 0.0
        %752 = vmatpush2.msra.mxu0 0.0
        %753 = vmatprep.subr.mxu0 0.0
        %754 = vmatpush2.msra.mxu0 0.0
        %755 = vmatprep.subr.mxu0 0.0
        %756 = vmatpush2.msra.mxu0 0.0
        %757 = vmatprep.subr.mxu0 0.0
        %758 = vmatpush2.msra.mxu0 0.0
        %759 = vmatprep.subr.mxu0 0.0
        %760 = vmatpush2.msra.mxu0 0.0
        %761 = vmatprep.subr.mxu0 0.0
        %762 = vmatpush2.msra.mxu0 0.0
        %763 = vmatprep.subr.mxu0 0.0
        %764 = vmatpush2.msra.mxu0 0.0
        %765 = vmatprep.subr.mxu0 0.0
        %766 = vmatpush2.msra.mxu0 0.0
        %767 = vmatprep.subr.mxu0 0.0
        %768 = vmatpush2.msra.mxu0 0.0
        %769 = vmatprep.mubr.f32.mxu0 0.0
        %770 = vmatmul.mubr.f32.gmra.mxu0 %v703
        %v771 = vpop.f32.mrf.mxu0
        %v772 = vadd.f32 %v699, %v771
        %v773 = vpop.f32.mrf.mxu0
        %774 = vdwg.mxu0
        %v775 = vmax.f32 %v772, 0.0
        %v776 = vld [vmem:[%s5] sm:$0xff]
        %v777 = vld [vmem:[%s5 + $0x8] sm:$0xff]
        %v778 = vld [vmem:[%s5 + $0x10] sm:$0xff]
        %v779 = vld [vmem:[%s5 + $0x18] sm:$0xff]
        %v780 = vld [vmem:[%s5 + $0x20] sm:$0xff]
        %v781 = vld [vmem:[%s5 + $0x28] sm:$0xff]
        %v782 = vld [vmem:[%s6] sm:$0x1]
        %v784 = vlaneseq
        %v785 = vshrl.u32 %v784, 7
        %v786 = vsub.s32 0, %v785
        %v787 = vrot.slane %v782, %v786
        %vm789 = vcmask 392192
        %v791 = vsel %vm789, %v775, 0
        %793 = vmatprep.subr.mxu0 0.0
        %794 = vmatpush1.msra.mxu0 0.0
        %795 = vmatprep.subr.mxu0 0.0
        %796 = vmatpush1.msra.mxu0 0.0
        %797 = vmatprep.subr.mxu0 0.0
        %798 = vmatpush1.msra.mxu0 0.0
        %799 = vmatprep.subr.mxu0 0.0
        %800 = vmatpush1.msra.mxu0 0.0
        %801 = vmatprep.subr.mxu0 0.0
        %802 = vmatpush1.msra.mxu0 0.0
        %803 = vmatprep.subr.mxu0 0.0
        %804 = vmatpush1.msra.mxu0 0.0
        %805 = vmatprep.subr.mxu0 0.0
        %806 = vmatpush1.msra.mxu0 0.0
        %807 = vmatprep.subr.mxu0 0.0
        %808 = vmatpush1.msra.mxu0 0.0
        %809 = vmatprep.subr.mxu0 0.0
        %810 = vmatpush1.msra.mxu0 0.0
        %811 = vmatprep.subr.mxu0 0.0
        %812 = vmatpush1.msra.mxu0 0.0
        %813 = vmatprep.subr.mxu0 0.0
        %814 = vmatpush1.msra.mxu0 %v781
        %815 = vmatprep.subr.mxu0 0.0
        %816 = vmatpush1.msra.mxu0 %v780
        %817 = vmatprep.subr.mxu0 0.0
        %818 = vmatpush1.msra.mxu0 %v779
        %819 = vmatprep.subr.mxu0 0.0
        %820 = vmatpush1.msra.mxu0 %v778
        %821 = vmatprep.subr.mxu0 0.0
        %822 = vmatpush1.msra.mxu0 %v777
        %823 = vmatprep.subr.mxu0 0.0
        %824 = vmatpush1.msra.mxu0 %v776
        %825 = vmatprep.subr.mxu0 0.0
        %826 = vmatpush2.msra.mxu0 0.0
        %827 = vmatprep.subr.mxu0 0.0
        %828 = vmatpush2.msra.mxu0 0.0
        %829 = vmatprep.subr.mxu0 0.0
        %830 = vmatpush2.msra.mxu0 0.0
        %831 = vmatprep.subr.mxu0 0.0
        %832 = vmatpush2.msra.mxu0 0.0
        %833 = vmatprep.subr.mxu0 0.0
        %834 = vmatpush2.msra.mxu0 0.0
        %835 = vmatprep.subr.mxu0 0.0
        %836 = vmatpush2.msra.mxu0 0.0
        %837 = vmatprep.subr.mxu0 0.0
        %838 = vmatpush2.msra.mxu0 0.0
        %839 = vmatprep.subr.mxu0 0.0
        %840 = vmatpush2.msra.mxu0 0.0
        %841 = vmatprep.subr.mxu0 0.0
        %842 = vmatpush2.msra.mxu0 0.0
        %843 = vmatprep.subr.mxu0 0.0
        %844 = vmatpush2.msra.mxu0 0.0
        %845 = vmatprep.subr.mxu0 0.0
        %846 = vmatpush2.msra.mxu0 0.0
        %847 = vmatprep.subr.mxu0 0.0
        %848 = vmatpush2.msra.mxu0 0.0
        %849 = vmatprep.subr.mxu0 0.0
        %850 = vmatpush2.msra.mxu0 0.0
        %851 = vmatprep.subr.mxu0 0.0
        %852 = vmatpush2.msra.mxu0 0.0
        %853 = vmatprep.subr.mxu0 0.0
        %854 = vmatpush2.msra.mxu0 0.0
        %855 = vmatprep.subr.mxu0 0.0
        %856 = vmatpush2.msra.mxu0 0.0
        %857 = vmatprep.mubr.f32.mxu0 0.0
        %858 = vmatmul.mubr.f32.gmra.mxu0 %v791
        %v859 = vpop.f32.mrf.mxu0
        %v860 = vadd.f32 %v787, %v859
        %v861 = vpop.f32.mrf.mxu0
        %862 = vdwg.mxu0
        %v863 = vld [vmem:[%s7] sm:$0xff]
        %v864 = vld [vmem:[%s7 + $0x8] sm:$0xff]
        %v865 = vld [vmem:[%s7 + $0x10] sm:$0xff]
        %v866 = vld [vmem:[%s7 + $0x18] sm:$0xff]
        %v867 = vld [vmem:[%s8] sm:$0x1]
        %v869 = vlaneseq
        %v870 = vshrl.u32 %v869, 7
        %v871 = vsub.s32 0, %v870
        %v872 = vrot.slane %v867, %v871
        %874 = vmatprep.subr.mxu0 0.0
        %875 = vmatpush1.msra.mxu0 0.0
        %876 = vmatprep.subr.mxu0 0.0
        %877 = vmatpush1.msra.mxu0 0.0
        %878 = vmatprep.subr.mxu0 0.0
        %879 = vmatpush1.msra.mxu0 0.0
        %880 = vmatprep.subr.mxu0 0.0
        %881 = vmatpush1.msra.mxu0 0.0
        %882 = vmatprep.subr.mxu0 0.0
        %883 = vmatpush1.msra.mxu0 0.0
        %884 = vmatprep.subr.mxu0 0.0
        %885 = vmatpush1.msra.mxu0 0.0
        %886 = vmatprep.subr.mxu0 0.0
        %887 = vmatpush1.msra.mxu0 0.0
        %888 = vmatprep.subr.mxu0 0.0
        %889 = vmatpush1.msra.mxu0 0.0
        %890 = vmatprep.subr.mxu0 0.0
        %891 = vmatpush1.msra.mxu0 0.0
        %892 = vmatprep.subr.mxu0 0.0
        %893 = vmatpush1.msra.mxu0 0.0
        %894 = vmatprep.subr.mxu0 0.0
        %895 = vmatpush1.msra.mxu0 0.0
        %896 = vmatprep.subr.mxu0 0.0
        %897 = vmatpush1.msra.mxu0 0.0
        %898 = vmatprep.subr.mxu0 0.0
        %899 = vmatpush1.msra.mxu0 %v866
        %900 = vmatprep.subr.mxu0 0.0
        %901 = vmatpush1.msra.mxu0 %v865
        %902 = vmatprep.subr.mxu0 0.0
        %903 = vmatpush1.msra.mxu0 %v864
        %904 = vmatprep.subr.mxu0 0.0
        %905 = vmatpush1.msra.mxu0 %v863
        %906 = vmatprep.subr.mxu0 0.0
        %907 = vmatpush2.msra.mxu0 0.0
        %908 = vmatprep.subr.mxu0 0.0
        %909 = vmatpush2.msra.mxu0 0.0
        %910 = vmatprep.subr.mxu0 0.0
        %911 = vmatpush2.msra.mxu0 0.0
        %912 = vmatprep.subr.mxu0 0.0
        %913 = vmatpush2.msra.mxu0 0.0
        %914 = vmatprep.subr.mxu0 0.0
        %915 = vmatpush2.msra.mxu0 0.0
        %916 = vmatprep.subr.mxu0 0.0
        %917 = vmatpush2.msra.mxu0 0.0
        %918 = vmatprep.subr.mxu0 0.0
        %919 = vmatpush2.msra.mxu0 0.0
        %920 = vmatprep.subr.mxu0 0.0
        %921 = vmatpush2.msra.mxu0 0.0
        %922 = vmatprep.subr.mxu0 0.0
        %923 = vmatpush2.msra.mxu0 0.0
        %924 = vmatprep.subr.mxu0 0.0
        %925 = vmatpush2.msra.mxu0 0.0
        %926 = vmatprep.subr.mxu0 0.0
        %927 = vmatpush2.msra.mxu0 0.0
        %928 = vmatprep.subr.mxu0 0.0
        %929 = vmatpush2.msra.mxu0 0.0
        %930 = vmatprep.subr.mxu0 0.0
        %931 = vmatpush2.msra.mxu0 0.0
        %932 = vmatprep.subr.mxu0 0.0
        %933 = vmatpush2.msra.mxu0 0.0
        %934 = vmatprep.subr.mxu0 0.0
        %935 = vmatpush2.msra.mxu0 0.0
        %936 = vmatprep.subr.mxu0 0.0
        %937 = vmatpush2.msra.mxu0 0.0
        %938 = vmatprep.mubr.f32.mxu0 0.0
        %939 = vmatmul.mubr.f32.gmra.mxu0 %v613
        %v940 = vpop.f32.mrf.mxu0
        %v941 = vadd.f32 %v872, %v940
        %v942 = vpop.f32.mrf.mxu0
        %943 = vdwg.mxu0
        %v944 = vmax.f32 %v941, 0.0
        %v945 = vld [vmem:[%s9] sm:$0xff]
        %v946 = vld [vmem:[%s9 + $0x8] sm:$0xff]
        %v947 = vld [vmem:[%s9 + $0x10] sm:$0xff]
        %v948 = vld [vmem:[%s9 + $0x18] sm:$0xff]
        %v949 = vld [vmem:[%s9 + $0x20] sm:$0xff]
        %v950 = vld [vmem:[%s9 + $0x28] sm:$0xff]
        %v951 = vld [vmem:[%s9 + $0x30] sm:$0xff]
        %v952 = vld [vmem:[%s9 + $0x38] sm:$0xff]
        %v953 = vld [vmem:[%s10] sm:$0x1]
        %v955 = vlaneseq
        %v956 = vshrl.u32 %v955, 7
        %v957 = vsub.s32 0, %v956
        %v958 = vrot.slane %v953, %v957
        %v961 = vsel %vm701, %v944, 0
        %963 = vmatprep.subr.mxu0 0.0
        %964 = vmatpush1.msra.mxu0 0.0
        %965 = vmatprep.subr.mxu0 0.0
        %966 = vmatpush1.msra.mxu0 0.0
        %967 = vmatprep.subr.mxu0 0.0
        %968 = vmatpush1.msra.mxu0 0.0
        %969 = vmatprep.subr.mxu0 0.0
        %970 = vmatpush1.msra.mxu0 0.0
        %971 = vmatprep.subr.mxu0 0.0
        %972 = vmatpush1.msra.mxu0 0.0
        %973 = vmatprep.subr.mxu0 0.0
        %974 = vmatpush1.msra.mxu0 0.0
        %975 = vmatprep.subr.mxu0 0.0
        %976 = vmatpush1.msra.mxu0 0.0
        %977 = vmatprep.subr.mxu0 0.0
        %978 = vmatpush1.msra.mxu0 0.0
        %979 = vmatprep.subr.mxu0 0.0
        %980 = vmatpush1.msra.mxu0 %v952
        %981 = vmatprep.subr.mxu0 0.0
        %982 = vmatpush1.msra.mxu0 %v951
        %983 = vmatprep.subr.mxu0 0.0
        %984 = vmatpush1.msra.mxu0 %v950
        %985 = vmatprep.subr.mxu0 0.0
        %986 = vmatpush1.msra.mxu0 %v949
        %987 = vmatprep.subr.mxu0 0.0
        %988 = vmatpush1.msra.mxu0 %v948
        %989 = vmatprep.subr.mxu0 0.0
        %990 = vmatpush1.msra.mxu0 %v947
        %991 = vmatprep.subr.mxu0 0.0
        %992 = vmatpush1.msra.mxu0 %v946
        %993 = vmatprep.subr.mxu0 0.0
        %994 = vmatpush1.msra.mxu0 %v945
        %995 = vmatprep.subr.mxu0 0.0
        %996 = vmatpush2.msra.mxu0 0.0
        %997 = vmatprep.subr.mxu0 0.0
        %998 = vmatpush2.msra.mxu0 0.0
        %999 = vmatprep.subr.mxu0 0.0
        %1000 = vmatpush2.msra.mxu0 0.0
        %1001 = vmatprep.subr.mxu0 0.0
        %1002 = vmatpush2.msra.mxu0 0.0
        %1003 = vmatprep.subr.mxu0 0.0
        %1004 = vmatpush2.msra.mxu0 0.0
        %1005 = vmatprep.subr.mxu0 0.0
        %1006 = vmatpush2.msra.mxu0 0.0
        %1007 = vmatprep.subr.mxu0 0.0
        %1008 = vmatpush2.msra.mxu0 0.0
        %1009 = vmatprep.subr.mxu0 0.0
        %1010 = vmatpush2.msra.mxu0 0.0
        %1011 = vmatprep.subr.mxu0 0.0
        %1012 = vmatpush2.msra.mxu0 0.0
        %1013 = vmatprep.subr.mxu0 0.0
        %1014 = vmatpush2.msra.mxu0 0.0
        %1015 = vmatprep.subr.mxu0 0.0
        %1016 = vmatpush2.msra.mxu0 0.0
        %1017 = vmatprep.subr.mxu0 0.0
        %1018 = vmatpush2.msra.mxu0 0.0
        %1019 = vmatprep.subr.mxu0 0.0
        %1020 = vmatpush2.msra.mxu0 0.0
        %1021 = vmatprep.subr.mxu0 0.0
        %1022 = vmatpush2.msra.mxu0 0.0
        %1023 = vmatprep.subr.mxu0 0.0
        %1024 = vmatpush2.msra.mxu0 0.0
        %1025 = vmatprep.subr.mxu0 0.0
        %1026 = vmatpush2.msra.mxu0 0.0
        %1027 = vmatprep.mubr.f32.mxu0 0.0
        %1028 = vmatmul.mubr.f32.gmra.mxu0 %v961
        %v1029 = vpop.f32.mrf.mxu0
        %v1030 = vadd.f32 %v958, %v1029
        %v1031 = vpop.f32.mrf.mxu0
        %1032 = vdwg.mxu0
        %v1033 = vld [vmem:[%s11] sm:$0xff]
        %v1034 = vld [vmem:[%s11 + $0x8] sm:$0xff]
        %v1035 = vld [vmem:[%s11 + $0x10] sm:$0xff]
        %v1036 = vld [vmem:[%s11 + $0x18] sm:$0xff]
        %v1037 = vld [vmem:[%s12] sm:$0x1]
        %v1039 = vlaneseq
        %v1040 = vshrl.u32 %v1039, 7
        %v1041 = vsub.s32 0, %v1040
        %v1042 = vrot.slane %v1037, %v1041
        %1044 = vmatprep.subr.mxu0 0.0
        %1045 = vmatpush1.msra.mxu0 0.0
        %1046 = vmatprep.subr.mxu0 0.0
        %1047 = vmatpush1.msra.mxu0 0.0
        %1048 = vmatprep.subr.mxu0 0.0
        %1049 = vmatpush1.msra.mxu0 0.0
        %1050 = vmatprep.subr.mxu0 0.0
        %1051 = vmatpush1.msra.mxu0 0.0
        %1052 = vmatprep.subr.mxu0 0.0
        %1053 = vmatpush1.msra.mxu0 0.0
        %1054 = vmatprep.subr.mxu0 0.0
        %1055 = vmatpush1.msra.mxu0 0.0
        %1056 = vmatprep.subr.mxu0 0.0
        %1057 = vmatpush1.msra.mxu0 0.0
        %1058 = vmatprep.subr.mxu0 0.0
        %1059 = vmatpush1.msra.mxu0 0.0
        %1060 = vmatprep.subr.mxu0 0.0
        %1061 = vmatpush1.msra.mxu0 0.0
        %1062 = vmatprep.subr.mxu0 0.0
        %1063 = vmatpush1.msra.mxu0 0.0
        %1064 = vmatprep.subr.mxu0 0.0
        %1065 = vmatpush1.msra.mxu0 0.0
        %1066 = vmatprep.subr.mxu0 0.0
        %1067 = vmatpush1.msra.mxu0 0.0
        %1068 = vmatprep.subr.mxu0 0.0
        %1069 = vmatpush1.msra.mxu0 %v1036
        %1070 = vmatprep.subr.mxu0 0.0
        %1071 = vmatpush1.msra.mxu0 %v1035
        %1072 = vmatprep.subr.mxu0 0.0
        %1073 = vmatpush1.msra.mxu0 %v1034
        %1074 = vmatprep.subr.mxu0 0.0
        %1075 = vmatpush1.msra.mxu0 %v1033
        %1076 = vmatprep.subr.mxu0 0.0
        %1077 = vmatpush2.msra.mxu0 0.0
        %1078 = vmatprep.subr.mxu0 0.0
        %1079 = vmatpush2.msra.mxu0 0.0
        %1080 = vmatprep.subr.mxu0 0.0
        %1081 = vmatpush2.msra.mxu0 0.0
        %1082 = vmatprep.subr.mxu0 0.0
        %1083 = vmatpush2.msra.mxu0 0.0
        %1084 = vmatprep.subr.mxu0 0.0
        %1085 = vmatpush2.msra.mxu0 0.0
        %1086 = vmatprep.subr.mxu0 0.0
        %1087 = vmatpush2.msra.mxu0 0.0
        %1088 = vmatprep.subr.mxu0 0.0
        %1089 = vmatpush2.msra.mxu0 0.0
        %1090 = vmatprep.subr.mxu0 0.0
        %1091 = vmatpush2.msra.mxu0 0.0
        %1092 = vmatprep.subr.mxu0 0.0
        %1093 = vmatpush2.msra.mxu0 0.0
        %1094 = vmatprep.subr.mxu0 0.0
        %1095 = vmatpush2.msra.mxu0 0.0
        %1096 = vmatprep.subr.mxu0 0.0
        %1097 = vmatpush2.msra.mxu0 0.0
        %1098 = vmatprep.subr.mxu0 0.0
        %1099 = vmatpush2.msra.mxu0 0.0
        %1100 = vmatprep.subr.mxu0 0.0
        %1101 = vmatpush2.msra.mxu0 0.0
        %1102 = vmatprep.subr.mxu0 0.0
        %1103 = vmatpush2.msra.mxu0 0.0
        %1104 = vmatprep.subr.mxu0 0.0
        %1105 = vmatpush2.msra.mxu0 0.0
        %1106 = vmatprep.subr.mxu0 0.0
        %1107 = vmatpush2.msra.mxu0 0.0
        %1108 = vmatprep.mubr.f32.mxu0 0.0
        %1109 = vmatmul.mubr.f32.gmra.mxu0 %v613
        %v1110 = vpop.f32.mrf.mxu0
        %v1111 = vadd.f32 %v1042, %v1110
        %v1112 = vpop.f32.mrf.mxu0
        %1113 = vdwg.mxu0
        %v1114 = vmax.f32 %v1111, 0.0
        %v1115 = vld [vmem:[%s13] sm:$0xff]
        %v1116 = vld [vmem:[%s13 + $0x8] sm:$0xff]
        %v1117 = vld [vmem:[%s13 + $0x10] sm:$0xff]
        %v1118 = vld [vmem:[%s13 + $0x18] sm:$0xff]
        %v1119 = vld [vmem:[%s13 + $0x20] sm:$0xff]
        %v1120 = vld [vmem:[%s13 + $0x28] sm:$0xff]
        %v1121 = vld [vmem:[%s13 + $0x30] sm:$0xff]
        %v1122 = vld [vmem:[%s13 + $0x38] sm:$0xff]
        %v1123 = vld [vmem:[%s14] sm:$0x1]
        %v1125 = vlaneseq
        %v1126 = vshrl.u32 %v1125, 7
        %v1127 = vsub.s32 0, %v1126
        %v1128 = vrot.slane %v1123, %v1127
        %v1131 = vsel %vm701, %v1114, 0
        %1133 = vmatprep.subr.mxu0 0.0
        %1134 = vmatpush1.msra.mxu0 0.0
        %1135 = vmatprep.subr.mxu0 0.0
        %1136 = vmatpush1.msra.mxu0 0.0
        %1137 = vmatprep.subr.mxu0 0.0
        %1138 = vmatpush1.msra.mxu0 0.0
        %1139 = vmatprep.subr.mxu0 0.0
        %1140 = vmatpush1.msra.mxu0 0.0
        %1141 = vmatprep.subr.mxu0 0.0
        %1142 = vmatpush1.msra.mxu0 0.0
        %1143 = vmatprep.subr.mxu0 0.0
        %1144 = vmatpush1.msra.mxu0 0.0
        %1145 = vmatprep.subr.mxu0 0.0
        %1146 = vmatpush1.msra.mxu0 0.0
        %1147 = vmatprep.subr.mxu0 0.0
        %1148 = vmatpush1.msra.mxu0 0.0
        %1149 = vmatprep.subr.mxu0 0.0
        %1150 = vmatpush1.msra.mxu0 %v1122
        %1151 = vmatprep.subr.mxu0 0.0
        %1152 = vmatpush1.msra.mxu0 %v1121
        %1153 = vmatprep.subr.mxu0 0.0
        %1154 = vmatpush1.msra.mxu0 %v1120
        %1155 = vmatprep.subr.mxu0 0.0
        %1156 = vmatpush1.msra.mxu0 %v1119
        %1157 = vmatprep.subr.mxu0 0.0
        %1158 = vmatpush1.msra.mxu0 %v1118
        %1159 = vmatprep.subr.mxu0 0.0
        %1160 = vmatpush1.msra.mxu0 %v1117
        %1161 = vmatprep.subr.mxu0 0.0
        %1162 = vmatpush1.msra.mxu0 %v1116
        %1163 = vmatprep.subr.mxu0 0.0
        %1164 = vmatpush1.msra.mxu0 %v1115
        %1165 = vmatprep.subr.mxu0 0.0
        %1166 = vmatpush2.msra.mxu0 0.0
        %1167 = vmatprep.subr.mxu0 0.0
        %1168 = vmatpush2.msra.mxu0 0.0
        %1169 = vmatprep.subr.mxu0 0.0
        %1170 = vmatpush2.msra.mxu0 0.0
        %1171 = vmatprep.subr.mxu0 0.0
        %1172 = vmatpush2.msra.mxu0 0.0
        %1173 = vmatprep.subr.mxu0 0.0
        %1174 = vmatpush2.msra.mxu0 0.0
        %1175 = vmatprep.subr.mxu0 0.0
        %1176 = vmatpush2.msra.mxu0 0.0
        %1177 = vmatprep.subr.mxu0 0.0
        %1178 = vmatpush2.msra.mxu0 0.0
        %1179 = vmatprep.subr.mxu0 0.0
        %1180 = vmatpush2.msra.mxu0 0.0
        %1181 = vmatprep.subr.mxu0 0.0
        %1182 = vmatpush2.msra.mxu0 0.0
        %1183 = vmatprep.subr.mxu0 0.0
        %1184 = vmatpush2.msra.mxu0 0.0
        %1185 = vmatprep.subr.mxu0 0.0
        %1186 = vmatpush2.msra.mxu0 0.0
        %1187 = vmatprep.subr.mxu0 0.0
        %1188 = vmatpush2.msra.mxu0 0.0
        %1189 = vmatprep.subr.mxu0 0.0
        %1190 = vmatpush2.msra.mxu0 0.0
        %1191 = vmatprep.subr.mxu0 0.0
        %1192 = vmatpush2.msra.mxu0 0.0
        %1193 = vmatprep.subr.mxu0 0.0
        %1194 = vmatpush2.msra.mxu0 0.0
        %1195 = vmatprep.subr.mxu0 0.0
        %1196 = vmatpush2.msra.mxu0 0.0
        %1197 = vmatprep.mubr.f32.mxu0 0.0
        %1198 = vmatmul.mubr.f32.gmra.mxu0 %v1131
        %v1199 = vpop.f32.mrf.mxu0
        %v1200 = vadd.f32 %v1128, %v1199
        %v1201 = vpop.f32.mrf.mxu0
        %1202 = vdwg.mxu0
        %v1203 = vmax.f32 %v1200, 0.0
        %v1204 = vadd.f32 %v860, %v1030
        %1205 = vst [vmem:[%s570] sm:$0xff] %v1204
        %1206 = vst [vmem:[%s598] sm:$0xff] %v1203
        %1207 = vst [vmem:[%s583] sm:$0xff] %v1030
        %1208 = vst [vmem:[%s590] sm:$0xff] %v860
        %s1209 = sand.u32 %s364, 1
        %s1210 = scalar_lea.sflag [#allocation3], %s1209
        %s1211 = sand.u32 %s364, 1
        %s1212 = smul.addr %s1211, 8
        %s1213 = scalar_lea.vmem [#allocation2], %s1212
        %p1214 = scmp.lt.s32.totalorder %s36, 1
        %s1215 = scalar_select %p1214, %s36, 1
        %s1216 = smul.addr %s1215, 8
        %s1217 = scalar_lea.vmem %s16, %s1216
        %s1218 = sand.u32 %s36, 1
        %s1219 = scalar_lea.sflag [#allocation5], %s1218
        %s1220 = sand.u32 %s416, 1
        %s1221 = smul.addr %s1220, 8
        %s1222 = scalar_lea.vmem [#allocation4], %s1221
        %s1223 = sand.u32 %s36, 1
        %s1224 = scalar_lea.sflag [#allocation5], %s1223
        %s1225 = sand.u32 %s442, 1
        %s1226 = smul.addr %s1225, 8
        %s1227 = scalar_lea.vmem [#allocation6], %s1226
        // Predicated region
        $region81: #{decomposition_forward.1} parent=79 // pred_check
          %p1228 = pneg %p374
        $region82: #{decomposition_forward.1} parent=79 // pred_check_branch
          %1230 = sbr.rel (%p1228) target = $region84
        $region83: #{decomposition_forward.1} parent=79 // pred_region
          %s1232 = ssub.s32 128, 128
          %1233 = vsyncadd %s1210, %s1232
          %s1234 = smul.addr %s36, 128
          %s1235 = scalar_lea.hbm %s15, %s1234
          %s1237 = sshll.u32 %s1213, 4
          %s1238 = int_to_ptr.vmem [resolvable:$true] %s1237
          %1240 = dma.vmem_to_hbm [thread:$0]  %s1238, 128, %s1235, %s1210
        $region84: #{decomposition_forward.1} parent=79 // pred_fallthru
          _
        // Predicated region
        $region85: #{decomposition_forward.1} parent=79 // pred_check
          %p1241 = pneg %p400
        $region86: #{decomposition_forward.1} parent=79 // pred_check_branch
          %1243 = sbr.rel (%p1241) target = $region88
        $region87: #{decomposition_forward.1} parent=79 // pred_region
          _
        $region88: #{decomposition_forward.1} parent=79 // pred_fallthru
          _
        // Predicated region
        $region89: #{decomposition_forward.1} parent=79 // pred_check
          %p1244 = pneg %p426
        $region90: #{decomposition_forward.1} parent=79 // pred_check_branch
          %1246 = sbr.rel (%p1244) target = $region92
        $region91: #{decomposition_forward.1} parent=79 // pred_region
          %s1248 = ssub.s32 128, 128
          %1249 = vsyncadd %s1219, %s1248
          %s1250 = smul.addr %s36, 128
          %s1251 = scalar_lea.hbm %s17, %s1250
          %s1253 = sshll.u32 %s1222, 4
          %s1254 = int_to_ptr.vmem [resolvable:$true] %s1253
          %1256 = dma.vmem_to_hbm [thread:$0]  %s1254, 128, %s1251, %s1219
        $region92: #{decomposition_forward.1} parent=79 // pred_fallthru
          _
        // Predicated region
        $region93: #{decomposition_forward.1} parent=79 // pred_check
          %p1257 = pneg %p452
        $region94: #{decomposition_forward.1} parent=79 // pred_check_branch
          %1259 = sbr.rel (%p1257) target = $region96
        $region95: #{decomposition_forward.1} parent=79 // pred_region
          %s1261 = ssub.s32 128, 128
          %1262 = vsyncadd %s1224, %s1261
          %s1263 = smul.addr %s36, 128
          %s1264 = scalar_lea.hbm %s18, %s1263
          %s1266 = sshll.u32 %s1227, 4
          %s1267 = int_to_ptr.vmem [resolvable:$true] %s1266
          %1269 = dma.vmem_to_hbm [thread:$0]  %s1267, 128, %s1264, %s1224
        $region96: #{decomposition_forward.1} parent=79 // pred_fallthru
          _
      $region80: #{decomposition_forward.1} parent=5 // pred_fallthru
        _
      %p1270 = scmp.le.s32.totalorder 2, %s31
      // Predicated region
      $region97: #{decomposition_forward.1} parent=5 // pred_check
        %p1271 = pneg %p1270
      $region98: #{decomposition_forward.1} parent=5 // pred_check_branch
        %1273 = sbr.rel (%p1271) target = $region100
      $region99: #{decomposition_forward.1} parent=5 // pred_region
        %s1274 = ssub.s32 %s31, 2
        // Predicated region
        $region101: #{decomposition_forward.1} parent=99 // pred_check
          %p1275 = pneg %p380
        $region102: #{decomposition_forward.1} parent=99 // pred_check_branch
          %1277 = sbr.rel (%p1275) target = $region104
        $region103: #{decomposition_forward.1} parent=99 // pred_region
          %s1278 = sand.u32 %s365, 1
          %s1279 = scalar_lea.sflag [#allocation3], %s1278
          %s1280 = sand.u32 %s365, 1
          %s1281 = smul.addr %s1280, 8
          %s1282 = scalar_lea.vmem [#allocation2], %s1281
          %1283 = dma.done %s1279, 128
        $region104: #{decomposition_forward.1} parent=99 // pred_fallthru
          _
        // Predicated region
        $region105: #{decomposition_forward.1} parent=99 // pred_check
          %p1284 = pneg %p406
        $region106: #{decomposition_forward.1} parent=99 // pred_check_branch
          %1286 = sbr.rel (%p1284) target = $region108
        $region107: #{decomposition_forward.1} parent=99 // pred_region
          %p1287 = scmp.lt.s32.totalorder %s37, 1
          %s1288 = scalar_select %p1287, %s37, 1
          %s1289 = smul.addr %s1288, 8
          %s1290 = scalar_lea.vmem %s16, %s1289
        $region108: #{decomposition_forward.1} parent=99 // pred_fallthru
          _
        // Predicated region
        $region109: #{decomposition_forward.1} parent=99 // pred_check
          %p1291 = pneg %p432
        $region110: #{decomposition_forward.1} parent=99 // pred_check_branch
          %1293 = sbr.rel (%p1291) target = $region112
        $region111: #{decomposition_forward.1} parent=99 // pred_region
          %s1294 = sand.u32 %s37, 1
          %s1295 = scalar_lea.sflag [#allocation5], %s1294
          %s1296 = sand.u32 %s417, 1
          %s1297 = smul.addr %s1296, 8
          %s1298 = scalar_lea.vmem [#allocation4], %s1297
          %1299 = dma.done %s1295, 128
        $region112: #{decomposition_forward.1} parent=99 // pred_fallthru
          _
        // Predicated region
        $region113: #{decomposition_forward.1} parent=99 // pred_check
          %p1300 = pneg %p458
        $region114: #{decomposition_forward.1} parent=99 // pred_check_branch
          %1302 = sbr.rel (%p1300) target = $region116
        $region115: #{decomposition_forward.1} parent=99 // pred_region
          %s1303 = sand.u32 %s37, 1
          %s1304 = scalar_lea.sflag [#allocation5], %s1303
          %s1305 = sand.u32 %s443, 1
          %s1306 = smul.addr %s1305, 8
          %s1307 = scalar_lea.vmem [#allocation6], %s1306
          %1308 = dma.done %s1304, 128
        $region116: #{decomposition_forward.1} parent=99 // pred_fallthru
          _
      $region100: #{decomposition_forward.1} parent=5 // pred_fallthru
        _
    $region6: #{decomposition_forward.1} parent=1 // loop_footer
      %s35 = sadd.s32 1, %s31
    $region7: #{decomposition_forward.1} parent=1 // loop_footer_branch
      %30 = sbr.rel target = $region3
    $region8: #{decomposition_forward.1} parent=1 // loop_exit
      _
    %1309 = vsyncpa [#allocation3], 1
    %s1310 = scalar_lea.sflag [#allocation3], 1
    %1311 = vsyncpa %s1310, 1
    %1312 = vsyncpa [#allocation5], 1
    %s1313 = scalar_lea.sflag [#allocation5], 1
    %1314 = vsyncpa %s1313, 1

</llo_original>
